<compile_context>
chip_gen: v6e
topology: v6e:2x2x1
jax: 0.10.0
libtpu: 0.0.40
codegen_flags: <defaults>
</compile_context>

<pallas_src>
import functools

import jax
import jax.numpy as jnp
from jax.experimental import pallas as pl
from jax.experimental.pallas import tpu as pltpu

_LN_EPS = 1e-5      # torch.nn.LayerNorm default eps
_NEG_INF = -1e30    # large finite negative (robust vs -inf in f32)


def _layernorm(x, gamma, beta):
    """Row-wise LayerNorm in f32. x: (N, C); gamma/beta: (1, C)."""
    mu = jnp.mean(x, axis=-1, keepdims=True)
    xc = x - mu
    var = jnp.mean(xc * xc, axis=-1, keepdims=True)
    inv = jax.lax.rsqrt(var + _LN_EPS)
    return xc * inv * gamma + beta


def _block_kernel(x_ref, wqkv_ref, wp_ref, bp_ref,
                  g1_ref, be1_ref, g2_ref, be2_ref,
                  w1_ref, b1f_ref, w2_ref, b2f_ref,
                  o_ref, *, n_heads, head_size, compute_dtype, approx_recip):
    """Bblk batch elements per grid step: full transformer block."""
    H, hs = n_heads, head_size
    xb = x_ref[...]                                   # (Bblk, T, C) f32
    Bblk, T, C = xb.shape
    BT = Bblk * T
    x = xb.reshape(BT, C)                             # rows = (batch, time)

    # ---- LayerNorm 1 (f32) ----
    xn1 = _layernorm(x, g1_ref[...], be1_ref[...])

    # ---- fused QKV projection: one lane-dense MXU matmul for all heads ----
    # wqkv: (C, 3*H*hs); Q columns already carry the 1/sqrt(hs) scale.
    qkv = jnp.dot(xn1.astype(compute_dtype), wqkv_ref[...],
                  preferred_element_type=jnp.float32)            # (BT, 3*H*hs)

    def heads_major(mat):
        # (BT, H*hs) -> (Bblk*H, T, hs): head-major for batched attention.
        m4 = mat.reshape(Bblk, T, H, hs)
        m4 = jnp.transpose(m4, (0, 2, 1, 3))
        return m4.reshape(Bblk * H, T, hs)

    q = heads_major(qkv[:, 0 * H * hs:1 * H * hs]).astype(compute_dtype)
    k = heads_major(qkv[:, 1 * H * hs:2 * H * hs]).astype(compute_dtype)
    v = heads_major(qkv[:, 2 * H * hs:3 * H * hs]).astype(compute_dtype)

    # ---- causal additive mask generated in-kernel (no DMA) ----
    row = jax.lax.broadcasted_iota(jnp.int32, (T, T), 0)
    col = jax.lax.broadcasted_iota(jnp.int32, (T, T), 1)
    mask = jnp.where(row >= col, 0.0, _NEG_INF).astype(jnp.float32)

    # ---- head-batched attention (no explicit k.T) ----
    s = jnp.einsum('zqd,zkd->zqk', q, k,
                   preferred_element_type=jnp.float32)           # (Bblk*H, T, T)
    s = s + mask[None, :, :]

    # numerically stable softmax in f32; reciprocal on the EUP slot
    m = jnp.max(s, axis=-1, keepdims=True)
    e = jnp.exp(s - m)
    l = jnp.sum(e, axis=-1, keepdims=True)
    p = e * pl.reciprocal(l, approx=approx_recip)

    ho = jnp.einsum('zqk,zkd->zqd', p.astype(compute_dtype), v,
                    preferred_element_type=jnp.float32)          # (Bblk*H, T, hs)
    ho = jnp.transpose(ho.reshape(Bblk, H, T, hs),
                       (0, 2, 1, 3)).reshape(BT, H * hs)

    # ---- single fused output projection (contraction depth K = H*hs) ----
    sa = jnp.dot(ho.astype(compute_dtype), wp_ref[...],
                 preferred_element_type=jnp.float32) + bp_ref[...]

    x1 = x + sa                                                  # residual 1 (f32)

    # ---- LayerNorm 2 + FeedForward (Linear -> ReLU -> Linear) ----
    xn2 = _layernorm(x1, g2_ref[...], be2_ref[...])
    h1 = jnp.dot(xn2.astype(compute_dtype), w1_ref[...],
                 preferred_element_type=jnp.float32) + b1f_ref[...]
    h1 = jnp.maximum(h1, 0.0)
    ff = jnp.dot(h1.astype(compute_dtype), w2_ref[...],          # bf16 fast path
                 preferred_element_type=jnp.float32) + b2f_ref[...]

    o_ref[...] = (x1 + ff).reshape(Bblk, T, C).astype(o_ref.dtype)   # residual 2


def _pick_bblk(batch):
    """Largest divisor of `batch` that still leaves >= 2 parallel grid steps
    (keeps both v7x TensorCores fed) while batching rows per step."""
    if batch <= 1:
        return 1
    target = batch // 2
    for cand in range(target, 0, -1):
        if batch % cand == 0:
            return cand
    return 1


def block_forward(x, wq, wk, wv, wp_t, bp, g1, be1, g2, be2,
                  w1_t, b1f, w2_t, b2f, *, n_heads, head_size,
                  compute_dtype=jnp.bfloat16, approx_recip=True, bblk=None):
    """x: (B,T,C); wq/wk/wv: (H,C,hs); wp_t: (H*hs,C); w1_t: (C,4C); w2_t: (4C,C);
    biases / LN params are (1, dim).  Returns (B, T, C) in x.dtype."""
    B, T, C = x.shape
    H, hs = n_heads, head_size
    if bblk is None:
        bblk = _pick_bblk(B)
    assert B % bblk == 0, "batch must be divisible by the per-step block"

    # Host-side weight fusion & lane-dense layout; fold 1/sqrt(hs) into Q cols.
    scale = hs ** (-0.5)
    w_q = jnp.transpose(wq, (1, 0, 2)).reshape(C, H * hs) * scale
    w_k = jnp.transpose(wk, (1, 0, 2)).reshape(C, H * hs)
    w_v = jnp.transpose(wv, (1, 0, 2)).reshape(C, H * hs)
    w_qkv = jnp.concatenate([w_q, w_k, w_v], axis=-1).astype(compute_dtype)
    wp_c = wp_t.astype(compute_dtype)
    w1_c = w1_t.astype(compute_dtype)
    w2_c = w2_t.astype(compute_dtype)

    kernel = functools.partial(_block_kernel, n_heads=H, head_size=hs,
                               compute_dtype=compute_dtype,
                               approx_recip=approx_recip)

    return pl.pallas_call(
        kernel,
        out_shape=jax.ShapeDtypeStruct((B, T, C), x.dtype),
        grid_spec=pltpu.PrefetchScalarGridSpec(
            num_scalar_prefetch=0,
            grid=(B // bblk,),
            in_specs=[
                pl.BlockSpec((bblk, T, C), lambda b: (b, 0, 0)),    # x
                pl.BlockSpec((C, 3 * H * hs), lambda b: (0, 0)),    # fused QKV weight
                pl.BlockSpec((H * hs, C), lambda b: (0, 0)),        # out-proj weight
                pl.BlockSpec((1, C), lambda b: (0, 0)),             # out-proj bias
                pl.BlockSpec((1, C), lambda b: (0, 0)),             # ln1 gamma
                pl.BlockSpec((1, C), lambda b: (0, 0)),             # ln1 beta
                pl.BlockSpec((1, C), lambda b: (0, 0)),             # ln2 gamma
                pl.BlockSpec((1, C), lambda b: (0, 0)),             # ln2 beta
                pl.BlockSpec((C, 4 * C), lambda b: (0, 0)),         # ffn W1
                pl.BlockSpec((1, 4 * C), lambda b: (0, 0)),         # ffn b1
                pl.BlockSpec((4 * C, C), lambda b: (0, 0)),         # ffn W2
                pl.BlockSpec((1, C), lambda b: (0, 0)),             # ffn b2
            ],
            out_specs=pl.BlockSpec((bblk, T, C), lambda b: (b, 0, 0)),
        ),
        compiler_params=pltpu.CompilerParams(
            dimension_semantics=("parallel",)),
    )(x, w_qkv, wp_c, bp, g1, be1, g2, be2, w1_c, b1f, w2_c, b2f)


def reference_block(x, wq, wk, wv, wp_t, bp, g1, be1, g2, be2,
                    w1_t, b1f, w2_t, b2f):
    """Pure-JAX f32 reference mirroring the PyTorch Block (dropout = identity)."""
    H, C, hs = wq.shape
    T = x.shape[1]

    def ln(y, g, b):
        mu = jnp.mean(y, axis=-1, keepdims=True)
        var = jnp.mean((y - mu) ** 2, axis=-1, keepdims=True)
        return (y - mu) * jax.lax.rsqrt(var + _LN_EPS) * g + b

    xn = ln(x, g1, be1)
    tril = jnp.tril(jnp.ones((T, T), dtype=bool))
    heads = []
    for h in range(H):
        q = xn @ wq[h]
        k = xn @ wk[h]
        v = xn @ wv[h]
        w = (q @ jnp.swapaxes(k, -2, -1)) * hs ** (-0.5)
        w = jnp.where(tril, w, -jnp.inf)
        w = jax.nn.softmax(w, axis=-1)
        heads.append(w @ v)
    sa = jnp.concatenate(heads, axis=-1) @ wp_t + bp[0]
    x1 = x + sa
    xn2 = ln(x1, g2, be2)
    ff = jnp.maximum(xn2 @ w1_t + b1f[0], 0.0) @ w2_t + b2f[0]
    return x1 + ff


if __name__ == "__main__":
    B, T = 2, 8                     # batch, block_size (sequence length)
    n_embeddings = 32
    n_heads = 4
    head_size = n_embeddings // n_heads   # 8
    dropout = 0.0                   # identity (eval mode)
    C = n_embeddings

    key = jax.random.PRNGKey(0)
    (kx, kq, kk, kv, kp, kb, kg1, kb1, kg2, kb2,
     kw1, kbf1, kw2, kbf2) = jax.random.split(key, 14)

    x = jax.random.normal(kx, (B, T, C), dtype=jnp.float32)

    # Per-head Q/K/V weights, pre-transposed as (H, C, hs) so y = x @ W matches
    # nn.Linear (y = x @ W^T) semantics.
    s_in = C ** (-0.5)
    wq = jax.random.uniform(kq, (n_heads, C, head_size), minval=-s_in, maxval=s_in,
                            dtype=jnp.float32)
    wk = jax.random.uniform(kk, (n_heads, C, head_size), minval=-s_in, maxval=s_in,
                            dtype=jnp.float32)
    wv = jax.random.uniform(kv, (n_heads, C, head_size), minval=-s_in, maxval=s_in,
                            dtype=jnp.float32)

    s_p = (n_heads * head_size) ** (-0.5)
    wp_t = jax.random.uniform(kp, (n_heads * head_size, C), minval=-s_p, maxval=s_p,
                              dtype=jnp.float32)
    bp = jax.random.uniform(kb, (1, C), minval=-s_p, maxval=s_p, dtype=jnp.float32)

    g1 = 1.0 + 0.1 * jax.random.normal(kg1, (1, C), dtype=jnp.float32)
    be1 = 0.1 * jax.random.normal(kb1, (1, C), dtype=jnp.float32)
    g2 = 1.0 + 0.1 * jax.random.normal(kg2, (1, C), dtype=jnp.float32)
    be2 = 0.1 * jax.random.normal(kb2, (1, C), dtype=jnp.float32)

    s_f1 = C ** (-0.5)
    w1_t = jax.random.uniform(kw1, (C, 4 * C), minval=-s_f1, maxval=s_f1,
                              dtype=jnp.float32)
    b1f = jax.random.uniform(kbf1, (1, 4 * C), minval=-s_f1, maxval=s_f1,
                             dtype=jnp.float32)
    s_f2 = (4 * C) ** (-0.5)
    w2_t = jax.random.uniform(kw2, (4 * C, C), minval=-s_f2, maxval=s_f2,
                              dtype=jnp.float32)
    b2f = jax.random.uniform(kbf2, (1, C), minval=-s_f2, maxval=s_f2,
                             dtype=jnp.float32)

    args = (x, wq, wk, wv, wp_t, bp, g1, be1, g2, be2, w1_t, b1f, w2_t, b2f)

    # Fast path: bf16 MXU inputs (f32 accumulate) + EUP approx reciprocal.
    out_fast = jax.block_until_ready(
        block_forward(*args, n_heads=n_heads, head_size=head_size,
                      compute_dtype=jnp.bfloat16, approx_recip=True))
    # Exact path: f32 end-to-end, exact reciprocal (strict numerical check).
    out_exact = jax.block_until_ready(
        block_forward(*args, n_heads=n_heads, head_size=head_size,
                      compute_dtype=jnp.float32, approx_recip=False))

    ref = reference_block(*args)

    assert out_fast.shape == (B, T, C) and out_exact.shape == (B, T, C)
    assert jnp.allclose(out_exact, ref, atol=1e-4, rtol=1e-4), "f32 kernel mismatch"
    assert jnp.allclose(out_fast, ref, atol=5e-2, rtol=5e-2), "bf16 kernel mismatch"

    print("KERNEL_OK")
</pallas_src>

<mosaic_0001>
module attributes {stable_mosaic.version = 11 : i64} {
  func.func @_block_kernel(%arg0: i32, %arg1: memref<1x8x32xf32, #tpu.memory_space<vmem>>, %arg2: memref<32x96xbf16, #tpu.memory_space<vmem>>, %arg3: memref<32x32xbf16, #tpu.memory_space<vmem>>, %arg4: memref<1x32xf32, #tpu.memory_space<vmem>>, %arg5: memref<1x32xf32, #tpu.memory_space<vmem>>, %arg6: memref<1x32xf32, #tpu.memory_space<vmem>>, %arg7: memref<1x32xf32, #tpu.memory_space<vmem>>, %arg8: memref<1x32xf32, #tpu.memory_space<vmem>>, %arg9: memref<32x128xbf16, #tpu.memory_space<vmem>>, %arg10: memref<1x128xf32, #tpu.memory_space<vmem>>, %arg11: memref<128x32xbf16, #tpu.memory_space<vmem>>, %arg12: memref<1x32xf32, #tpu.memory_space<vmem>>, %arg13: memref<1x8x32xf32, #tpu.memory_space<vmem>>) attributes {dimension_semantics = [#tpu.dimension_semantics<parallel>], iteration_bounds = array<i64: 2>, scalar_prefetch = 0 : i64, scratch_operands = 0 : i64, tpu.core_type = #tpu.core_type<tc>, window_params = [{transform_indices = @transform_0, window_bounds = array<i64: 1, 8, 32>}, {pipeline_mode = #tpu.pipeline_mode<synchronous>, transform_indices = @transform_1, window_bounds = array<i64: 32, 96>}, {pipeline_mode = #tpu.pipeline_mode<synchronous>, transform_indices = @transform_2, window_bounds = array<i64: 32, 32>}, {pipeline_mode = #tpu.pipeline_mode<synchronous>, transform_indices = @transform_3, window_bounds = array<i64: 1, 32>}, {pipeline_mode = #tpu.pipeline_mode<synchronous>, transform_indices = @transform_4, window_bounds = array<i64: 1, 32>}, {pipeline_mode = #tpu.pipeline_mode<synchronous>, transform_indices = @transform_5, window_bounds = array<i64: 1, 32>}, {pipeline_mode = #tpu.pipeline_mode<synchronous>, transform_indices = @transform_6, window_bounds = array<i64: 1, 32>}, {pipeline_mode = #tpu.pipeline_mode<synchronous>, transform_indices = @transform_7, window_bounds = array<i64: 1, 32>}, {pipeline_mode = #tpu.pipeline_mode<synchronous>, transform_indices = @transform_8, window_bounds = array<i64: 32, 128>}, {pipeline_mode = #tpu.pipeline_mode<synchronous>, transform_indices = @transform_9, window_bounds = array<i64: 1, 128>}, {pipeline_mode = #tpu.pipeline_mode<synchronous>, transform_indices = @transform_10, window_bounds = array<i64: 128, 32>}, {pipeline_mode = #tpu.pipeline_mode<synchronous>, transform_indices = @transform_11, window_bounds = array<i64: 1, 32>}, {transform_indices = @transform_12, window_bounds = array<i64: 1, 8, 32>}]} {
    %c0 = arith.constant 0 : index
    %c0_0 = arith.constant 0 : index
    %c0_1 = arith.constant 0 : index
    %0 = vector.load %arg1[%c0, %c0_0, %c0_1] : memref<1x8x32xf32, #tpu.memory_space<vmem>>, vector<1x8x32xf32>
    %1 = vector.shape_cast %0 : vector<1x8x32xf32> to vector<8x32xf32>
    %c0_2 = arith.constant 0 : index
    %c0_3 = arith.constant 0 : index
    %2 = vector.load %arg5[%c0_2, %c0_3] : memref<1x32xf32, #tpu.memory_space<vmem>>, vector<1x32xf32>
    %c0_4 = arith.constant 0 : index
    %c0_5 = arith.constant 0 : index
    %3 = vector.load %arg6[%c0_4, %c0_5] : memref<1x32xf32, #tpu.memory_space<vmem>>, vector<1x32xf32>
    %cst = arith.constant dense<0.000000e+00> : vector<8xf32>
    %4 = vector.multi_reduction <add>, %1, %cst [1] : vector<8x32xf32> to vector<8xf32>
    %5 = vector.shape_cast %4 : vector<8xf32> to vector<8x1xf32>
    %cst_6 = arith.constant 3.200000e+01 : f32
    %6 = vector.broadcast %cst_6 : f32 to vector<8x1xf32>
    %7 = arith.divf %5, %6 : vector<8x1xf32>
    %8 = vector.broadcast %7 : vector<8x1xf32> to vector<8x32xf32>
    %9 = arith.subf %1, %8 : vector<8x32xf32>
    %10 = arith.mulf %9, %9 : vector<8x32xf32>
    %cst_7 = arith.constant dense<0.000000e+00> : vector<8xf32>
    %11 = vector.multi_reduction <add>, %10, %cst_7 [1] : vector<8x32xf32> to vector<8xf32>
    %12 = vector.shape_cast %11 : vector<8xf32> to vector<8x1xf32>
    %cst_8 = arith.constant 3.200000e+01 : f32
    %13 = vector.broadcast %cst_8 : f32 to vector<8x1xf32>
    %14 = arith.divf %12, %13 : vector<8x1xf32>
    %cst_9 = arith.constant 9.99999974E-6 : f32
    %15 = vector.broadcast %cst_9 : f32 to vector<8x1xf32>
    %16 = arith.addf %14, %15 : vector<8x1xf32>
    %17 = math.rsqrt %16 : vector<8x1xf32>
    %18 = vector.broadcast %17 : vector<8x1xf32> to vector<8x32xf32>
    %19 = arith.mulf %9, %18 : vector<8x32xf32>
    %20 = vector.broadcast %2 : vector<1x32xf32> to vector<8x32xf32>
    %21 = arith.mulf %19, %20 : vector<8x32xf32>
    %22 = vector.broadcast %3 : vector<1x32xf32> to vector<8x32xf32>
    %23 = arith.addf %21, %22 : vector<8x32xf32>
    %24 = arith.truncf %23 : vector<8x32xf32> to vector<8x32xbf16>
    %c0_10 = arith.constant 0 : index
    %c0_11 = arith.constant 0 : index
    %25 = vector.load %arg2[%c0_10, %c0_11] : memref<32x96xbf16, #tpu.memory_space<vmem>>, vector<32x96xbf16>
    %cst_12 = arith.constant dense<0.000000e+00> : vector<8x96xf32>
    %26 = tpu.matmul %24, %25, %cst_12 {dimension_numbers = #tpu.dot_dimension_numbers<[1], [0], [0], [1], [0, 0, 1, 1], [], []>} : vector<8x32xbf16>, vector<32x96xbf16>, vector<8x96xf32> -> vector<8x96xf32>
    %27 = vector.extract_strided_slice %26 {offsets = [0, 0], sizes = [8, 32], strides = [1, 1]} : vector<8x96xf32> to vector<8x32xf32>
    %28 = vector.shape_cast %27 : vector<8x32xf32> to vector<1x8x4x8xf32>
    %29 = tpu.transpose %28, [0, 2, 1, 3] : vector<1x8x4x8xf32> -> vector<1x4x8x8xf32>
    %30 = vector.shape_cast %29 : vector<1x4x8x8xf32> to vector<4x8x8xf32>
    %31 = arith.truncf %30 : vector<4x8x8xf32> to vector<4x8x8xbf16>
    %32 = vector.extract_strided_slice %26 {offsets = [0, 32], sizes = [8, 32], strides = [1, 1]} : vector<8x96xf32> to vector<8x32xf32>
    %33 = vector.shape_cast %32 : vector<8x32xf32> to vector<1x8x4x8xf32>
    %34 = tpu.transpose %33, [0, 2, 1, 3] : vector<1x8x4x8xf32> -> vector<1x4x8x8xf32>
    %35 = vector.shape_cast %34 : vector<1x4x8x8xf32> to vector<4x8x8xf32>
    %36 = arith.truncf %35 : vector<4x8x8xf32> to vector<4x8x8xbf16>
    %37 = vector.extract_strided_slice %26 {offsets = [0, 64], sizes = [8, 32], strides = [1, 1]} : vector<8x96xf32> to vector<8x32xf32>
    %38 = vector.shape_cast %37 : vector<8x32xf32> to vector<1x8x4x8xf32>
    %39 = tpu.transpose %38, [0, 2, 1, 3] : vector<1x8x4x8xf32> -> vector<1x4x8x8xf32>
    %40 = vector.shape_cast %39 : vector<1x4x8x8xf32> to vector<4x8x8xf32>
    %41 = arith.truncf %40 : vector<4x8x8xf32> to vector<4x8x8xbf16>
    %42 = tpu.iota {dimensions = array<i32: 0>} : vector<8x8xi32>
    %43 = tpu.iota {dimensions = array<i32: 1>} : vector<8x8xi32>
    %44 = arith.cmpi sge, %42, %43 : vector<8x8xi32>
    %cst_13 = arith.constant 0.000000e+00 : f32
    %cst_14 = arith.constant -1.000000e+30 : f32
    %45 = vector.broadcast %cst_13 : f32 to vector<8x8xf32>
    %46 = vector.broadcast %cst_14 : f32 to vector<8x8xf32>
    %47 = arith.select %44, %45, %46 : vector<8x8xi1>, vector<8x8xf32>
    "tpu.trace_start"() <{level = 10 : i32, message = "zqd,zkd->zqk"}> : () -> ()
    %cst_15 = arith.constant dense<0.000000e+00> : vector<4x8x8xf32>
    %48 = tpu.matmul %31, %36, %cst_15 {dimension_numbers = #tpu.dot_dimension_numbers<[2], [2], [1], [1], [0, 0, 0, 1, 1, 1], [0], [0]>} : vector<4x8x8xbf16>, vector<4x8x8xbf16>, vector<4x8x8xf32> -> vector<4x8x8xf32>
    "tpu.trace_stop"() : () -> ()
    %49 = vector.shape_cast %47 : vector<8x8xf32> to vector<1x8x8xf32>
    %50 = vector.broadcast %49 : vector<1x8x8xf32> to vector<4x8x8xf32>
    %51 = arith.addf %48, %50 : vector<4x8x8xf32>
    %cst_16 = arith.constant dense<0xFF800000> : vector<4x8xf32>
    %52 = vector.multi_reduction <maximumf>, %51, %cst_16 [2] : vector<4x8x8xf32> to vector<4x8xf32>
    %53 = vector.shape_cast %52 : vector<4x8xf32> to vector<4x8x1xf32>
    %54 = vector.broadcast %53 : vector<4x8x1xf32> to vector<4x8x8xf32>
    %55 = arith.subf %51, %54 : vector<4x8x8xf32>
    %56 = math.exp %55 : vector<4x8x8xf32>
    %cst_17 = arith.constant dense<0.000000e+00> : vector<4x8xf32>
    %57 = vector.multi_reduction <add>, %56, %cst_17 [2] : vector<4x8x8xf32> to vector<4x8xf32>
    %58 = vector.shape_cast %57 : vector<4x8xf32> to vector<4x8x1xf32>
    %59 = tpu.reciprocal %58 {approx = true} : vector<4x8x1xf32> -> vector<4x8x1xf32>
    %60 = vector.broadcast %59 : vector<4x8x1xf32> to vector<4x8x8xf32>
    %61 = arith.mulf %56, %60 : vector<4x8x8xf32>
    %62 = arith.truncf %61 : vector<4x8x8xf32> to vector<4x8x8xbf16>
    "tpu.trace_start"() <{level = 10 : i32, message = "zqk,zkd->zqd"}> : () -> ()
    %cst_18 = arith.constant dense<0.000000e+00> : vector<4x8x8xf32>
    %63 = tpu.matmul %62, %41, %cst_18 {dimension_numbers = #tpu.dot_dimension_numbers<[2], [1], [1], [2], [0, 0, 0, 1, 1, 2], [0], [0]>} : vector<4x8x8xbf16>, vector<4x8x8xbf16>, vector<4x8x8xf32> -> vector<4x8x8xf32>
    "tpu.trace_stop"() : () -> ()
    %64 = vector.shape_cast %63 : vector<4x8x8xf32> to vector<1x4x8x8xf32>
    %65 = tpu.transpose %64, [0, 2, 1, 3] : vector<1x4x8x8xf32> -> vector<1x8x4x8xf32>
    %66 = vector.shape_cast %65 : vector<1x8x4x8xf32> to vector<8x32xf32>
    %67 = arith.truncf %66 : vector<8x32xf32> to vector<8x32xbf16>
    %c0_19 = arith.constant 0 : index
    %c0_20 = arith.constant 0 : index
    %68 = vector.load %arg3[%c0_19, %c0_20] : memref<32x32xbf16, #tpu.memory_space<vmem>>, vector<32x32xbf16>
    %cst_21 = arith.constant dense<0.000000e+00> : vector<8x32xf32>
    %69 = tpu.matmul %67, %68, %cst_21 {dimension_numbers = #tpu.dot_dimension_numbers<[1], [0], [0], [1], [0, 0, 1, 1], [], []>} : vector<8x32xbf16>, vector<32x32xbf16>, vector<8x32xf32> -> vector<8x32xf32>
    %c0_22 = arith.constant 0 : index
    %c0_23 = arith.constant 0 : index
    %70 = vector.load %arg4[%c0_22, %c0_23] : memref<1x32xf32, #tpu.memory_space<vmem>>, vector<1x32xf32>
    %71 = vector.broadcast %70 : vector<1x32xf32> to vector<8x32xf32>
    %72 = arith.addf %69, %71 : vector<8x32xf32>
    %73 = arith.addf %1, %72 : vector<8x32xf32>
    %c0_24 = arith.constant 0 : index
    %c0_25 = arith.constant 0 : index
    %74 = vector.load %arg7[%c0_24, %c0_25] : memref<1x32xf32, #tpu.memory_space<vmem>>, vector<1x32xf32>
    %c0_26 = arith.constant 0 : index
    %c0_27 = arith.constant 0 : index
    %75 = vector.load %arg8[%c0_26, %c0_27] : memref<1x32xf32, #tpu.memory_space<vmem>>, vector<1x32xf32>
    %cst_28 = arith.constant dense<0.000000e+00> : vector<8xf32>
    %76 = vector.multi_reduction <add>, %73, %cst_28 [1] : vector<8x32xf32> to vector<8xf32>
    %77 = vector.shape_cast %76 : vector<8xf32> to vector<8x1xf32>
    %cst_29 = arith.constant 3.200000e+01 : f32
    %78 = vector.broadcast %cst_29 : f32 to vector<8x1xf32>
    %79 = arith.divf %77, %78 : vector<8x1xf32>
    %80 = vector.broadcast %79 : vector<8x1xf32> to vector<8x32xf32>
    %81 = arith.subf %73, %80 : vector<8x32xf32>
    %82 = arith.mulf %81, %81 : vector<8x32xf32>
    %cst_30 = arith.constant dense<0.000000e+00> : vector<8xf32>
    %83 = vector.multi_reduction <add>, %82, %cst_30 [1] : vector<8x32xf32> to vector<8xf32>
    %84 = vector.shape_cast %83 : vector<8xf32> to vector<8x1xf32>
    %cst_31 = arith.constant 3.200000e+01 : f32
    %85 = vector.broadcast %cst_31 : f32 to vector<8x1xf32>
    %86 = arith.divf %84, %85 : vector<8x1xf32>
    %cst_32 = arith.constant 9.99999974E-6 : f32
    %87 = vector.broadcast %cst_32 : f32 to vector<8x1xf32>
    %88 = arith.addf %86, %87 : vector<8x1xf32>
    %89 = math.rsqrt %88 : vector<8x1xf32>
    %90 = vector.broadcast %89 : vector<8x1xf32> to vector<8x32xf32>
    %91 = arith.mulf %81, %90 : vector<8x32xf32>
    %92 = vector.broadcast %74 : vector<1x32xf32> to vector<8x32xf32>
    %93 = arith.mulf %91, %92 : vector<8x32xf32>
    %94 = vector.broadcast %75 : vector<1x32xf32> to vector<8x32xf32>
    %95 = arith.addf %93, %94 : vector<8x32xf32>
    %96 = arith.truncf %95 : vector<8x32xf32> to vector<8x32xbf16>
    %c0_33 = arith.constant 0 : index
    %c0_34 = arith.constant 0 : index
    %97 = vector.load %arg9[%c0_33, %c0_34] : memref<32x128xbf16, #tpu.memory_space<vmem>>, vector<32x128xbf16>
    %cst_35 = arith.constant dense<0.000000e+00> : vector<8x128xf32>
    %98 = tpu.matmul %96, %97, %cst_35 {dimension_numbers = #tpu.dot_dimension_numbers<[1], [0], [0], [1], [0, 0, 1, 1], [], []>} : vector<8x32xbf16>, vector<32x128xbf16>, vector<8x128xf32> -> vector<8x128xf32>
    %c0_36 = arith.constant 0 : index
    %c0_37 = arith.constant 0 : index
    %99 = vector.load %arg10[%c0_36, %c0_37] : memref<1x128xf32, #tpu.memory_space<vmem>>, vector<1x128xf32>
    %100 = vector.broadcast %99 : vector<1x128xf32> to vector<8x128xf32>
    %101 = arith.addf %98, %100 : vector<8x128xf32>
    %cst_38 = arith.constant 0.000000e+00 : f32
    %102 = vector.broadcast %cst_38 : f32 to vector<8x128xf32>
    %103 = arith.maximumf %101, %102 : vector<8x128xf32>
    %104 = arith.truncf %103 : vector<8x128xf32> to vector<8x128xbf16>
    %c0_39 = arith.constant 0 : index
    %c0_40 = arith.constant 0 : index
    %105 = vector.load %arg11[%c0_39, %c0_40] : memref<128x32xbf16, #tpu.memory_space<vmem>>, vector<128x32xbf16>
    %cst_41 = arith.constant dense<0.000000e+00> : vector<8x32xf32>
    %106 = tpu.matmul %104, %105, %cst_41 {dimension_numbers = #tpu.dot_dimension_numbers<[1], [0], [0], [1], [0, 0, 1, 1], [], []>} : vector<8x128xbf16>, vector<128x32xbf16>, vector<8x32xf32> -> vector<8x32xf32>
    %c0_42 = arith.constant 0 : index
    %c0_43 = arith.constant 0 : index
    %107 = vector.load %arg12[%c0_42, %c0_43] : memref<1x32xf32, #tpu.memory_space<vmem>>, vector<1x32xf32>
    %108 = vector.broadcast %107 : vector<1x32xf32> to vector<8x32xf32>
    %109 = arith.addf %106, %108 : vector<8x32xf32>
    %110 = arith.addf %73, %109 : vector<8x32xf32>
    %111 = vector.shape_cast %110 : vector<8x32xf32> to vector<1x8x32xf32>
    %c0_44 = arith.constant 0 : index
    %c0_45 = arith.constant 0 : index
    %c0_46 = arith.constant 0 : index
    %112 = vector.load %arg13[%c0_44, %c0_45, %c0_46] : memref<1x8x32xf32, #tpu.memory_space<vmem>>, vector<1x8x32xf32>
    tpu.vector_store %arg13[%c0_44, %c0_45, %c0_46], %111 {strides = array<i32>} : memref<1x8x32xf32, #tpu.memory_space<vmem>>, vector<1x8x32xf32>,
    return
  }
  func.func @transform_0(%arg0: i32) -> (i32, i32, i32) {
    %c0_i32 = arith.constant 0 : i32
    %c0_i32_0 = arith.constant 0 : i32
    %c0_i32_1 = arith.constant 0 : i32
    return %arg0, %c0_i32, %c0_i32_0 : i32, i32, i32
  }
  func.func @transform_1(%arg0: i32) -> (i32, i32) {
    %c0_i32 = arith.constant 0 : i32
    %c0_i32_0 = arith.constant 0 : i32
    %c0_i32_1 = arith.constant 0 : i32
    return %c0_i32, %c0_i32_0 : i32, i32
  }
  func.func @transform_2(%arg0: i32) -> (i32, i32) {
    %c0_i32 = arith.constant 0 : i32
    %c0_i32_0 = arith.constant 0 : i32
    %c0_i32_1 = arith.constant 0 : i32
    return %c0_i32, %c0_i32_0 : i32, i32
  }
  func.func @transform_3(%arg0: i32) -> (i32, i32) {
    %c0_i32 = arith.constant 0 : i32
    %c0_i32_0 = arith.constant 0 : i32
    %c0_i32_1 = arith.constant 0 : i32
    return %c0_i32, %c0_i32_0 : i32, i32
  }
  func.func @transform_4(%arg0: i32) -> (i32, i32) {
    %c0_i32 = arith.constant 0 : i32
    %c0_i32_0 = arith.constant 0 : i32
    %c0_i32_1 = arith.constant 0 : i32
    return %c0_i32, %c0_i32_0 : i32, i32
  }
  func.func @transform_5(%arg0: i32) -> (i32, i32) {
    %c0_i32 = arith.constant 0 : i32
    %c0_i32_0 = arith.constant 0 : i32
    %c0_i32_1 = arith.constant 0 : i32
    return %c0_i32, %c0_i32_0 : i32, i32
  }
  func.func @transform_6(%arg0: i32) -> (i32, i32) {
    %c0_i32 = arith.constant 0 : i32
    %c0_i32_0 = arith.constant 0 : i32
    %c0_i32_1 = arith.constant 0 : i32
    return %c0_i32, %c0_i32_0 : i32, i32
  }
  func.func @transform_7(%arg0: i32) -> (i32, i32) {
    %c0_i32 = arith.constant 0 : i32
    %c0_i32_0 = arith.constant 0 : i32
    %c0_i32_1 = arith.constant 0 : i32
    return %c0_i32, %c0_i32_0 : i32, i32
  }
  func.func @transform_8(%arg0: i32) -> (i32, i32) {
    %c0_i32 = arith.constant 0 : i32
    %c0_i32_0 = arith.constant 0 : i32
    %c0_i32_1 = arith.constant 0 : i32
    return %c0_i32, %c0_i32_0 : i32, i32
  }
  func.func @transform_9(%arg0: i32) -> (i32, i32) {
    %c0_i32 = arith.constant 0 : i32
    %c0_i32_0 = arith.constant 0 : i32
    %c0_i32_1 = arith.constant 0 : i32
    return %c0_i32, %c0_i32_0 : i32, i32
  }
  func.func @transform_10(%arg0: i32) -> (i32, i32) {
    %c0_i32 = arith.constant 0 : i32
    %c0_i32_0 = arith.constant 0 : i32
    %c0_i32_1 = arith.constant 0 : i32
    return %c0_i32, %c0_i32_0 : i32, i32
  }
  func.func @transform_11(%arg0: i32) -> (i32, i32) {
    %c0_i32 = arith.constant 0 : i32
    %c0_i32_0 = arith.constant 0 : i32
    %c0_i32_1 = arith.constant 0 : i32
    return %c0_i32, %c0_i32_0 : i32, i32
  }
  func.func @transform_12(%arg0: i32) -> (i32, i32, i32) {
    %c0_i32 = arith.constant 0 : i32
    %c0_i32_0 = arith.constant 0 : i32
    %c0_i32_1 = arith.constant 0 : i32
    return %arg0, %c0_i32, %c0_i32_0 : i32, i32, i32
  }
}

</mosaic_0001>

<llo_original>
// kernel: tpu_custom_call.1
$region0: #{tpu_custom_call.1}
  #allocation0 [shape = 'u32[]', space=smem, size = 0x4, offset = 0x4, fixed_abs, tag = 'smem constant byte address 0x4 - core index']
  #allocation1 [shape = 'u32[144,128]{1,0:T(1,128)}', space=vmem, size = 0x12000, scoped, tag = 'internal scratch']
  %s0 = inlined_call_operand.vmem [shape: f32[2,8,32], index: 0, kind: input, shape index: {}]
  %s1 = inlined_call_operand.vmem [shape: bf16[32,96], index: 1, kind: input, shape index: {}]
  %s2 = inlined_call_operand.vmem [shape: bf16[32,32], index: 2, kind: input, shape index: {}]
  %s3 = inlined_call_operand.vmem [shape: f32[1,32], index: 3, kind: input, shape index: {}]
  %s4 = inlined_call_operand.vmem [shape: f32[1,32], index: 4, kind: input, shape index: {}]
  %s5 = inlined_call_operand.vmem [shape: f32[1,32], index: 5, kind: input, shape index: {}]
  %s6 = inlined_call_operand.vmem [shape: f32[1,32], index: 6, kind: input, shape index: {}]
  %s7 = inlined_call_operand.vmem [shape: f32[1,32], index: 7, kind: input, shape index: {}]
  %s8 = inlined_call_operand.vmem [shape: bf16[32,128], index: 8, kind: input, shape index: {}]
  %s9 = inlined_call_operand.vmem [shape: f32[1,128], index: 9, kind: input, shape index: {}]
  %s10 = inlined_call_operand.vmem [shape: bf16[128,32], index: 10, kind: input, shape index: {}]
  %s11 = inlined_call_operand.vmem [shape: f32[1,32], index: 11, kind: input, shape index: {}]
  %s12 = inlined_call_operand.hbm [shape: f32[2,8,32], index: 12, kind: output, shape index: {}]
  %s13 = sld [smem:[#allocation0]]
  $region81: #{tpu_custom_call.1} parent=0
    _
  %s15 = ssub.s32 1, %s13
  %s16 = scalar_select 0, %s15, %s13
  $region1: #{tpu_custom_call.1} parent=0
    #allocation2 [shape = 'u8[8192]{0}', space=vmem, size = 0x2000, scoped, tag = 'output window, operand 0']
    #allocation3 [shape = 's32[2]{0}', space=sflag, size = 0x8, scoped, tag = 'scoped memory for tpu_custom_call.1']
    %17 = vsyncpa [#allocation3], 0
    %s18 = scalar_lea.sflag [#allocation3], 1
    %19 = vsyncpa %s18, 0
    loop: start=0, step=1, limit=4
    $region2: #{tpu_custom_call.1} parent=1 // loop_pre_header
      _
    $region3: #{tpu_custom_call.1} parent=1 // loop_header
      %s21 = sphi 0, %s25
      %p22 = scmp.ge.s32.totalorder %s21, 4
      %s31 = sphi 0, %s33
      %s34 = sphi 0, %s31
      %s35 = sphi 0, %s34
      %s51 = sphi 0, %s35
      %s55 = sphi 0, %s55
      %s57 = sphi 0, %s55
      %s58 = sphi 0, %s57
      %s72 = sphi 0, %s58
      %s76 = sphi 0, %s76
      %s78 = sphi 0, %s76
      %s79 = sphi 0, %s78
      %s93 = sphi 0, %s79
      %s97 = sphi 0, %s97
      %s99 = sphi 0, %s97
      %s100 = sphi 0, %s99
      %s114 = sphi 0, %s100
      %s118 = sphi 0, %s118
      %s120 = sphi 0, %s118
      %s121 = sphi 0, %s120
      %s135 = sphi 0, %s121
      %s139 = sphi 0, %s139
      %s141 = sphi 0, %s139
      %s142 = sphi 0, %s141
      %s156 = sphi 0, %s142
      %s160 = sphi 0, %s160
      %s162 = sphi 0, %s160
      %s163 = sphi 0, %s162
      %s177 = sphi 0, %s163
      %s181 = sphi 0, %s181
      %s183 = sphi 0, %s181
      %s184 = sphi 0, %s183
      %s198 = sphi 0, %s184
      %s202 = sphi 0, %s202
      %s204 = sphi 0, %s202
      %s205 = sphi 0, %s204
      %s219 = sphi 0, %s205
      %s223 = sphi 0, %s223
      %s225 = sphi 0, %s223
      %s226 = sphi 0, %s225
      %s240 = sphi 0, %s226
      %s244 = sphi 0, %s244
      %s246 = sphi 0, %s244
      %s247 = sphi 0, %s246
      %s261 = sphi 0, %s247
      %s265 = sphi 0, %s265
      %s267 = sphi 0, %s265
      %s268 = sphi 0, %s267
      %s282 = sphi 0, %s268
      %s288 = sphi 0, %s290
      %s291 = sphi 0, %s288
      %s292 = sphi 0, %s291
      %s308 = sphi 0, %s292
    $region4: #{tpu_custom_call.1} parent=1 // loop_header_branch
      %24 = sbr.rel (%p22) target = $region8
    $region5: #{tpu_custom_call.1} parent=1 // loop_body
      %s26 = ssub.s32 %s21, 1
      %s27 = ssub.s32 %s21, 2
      %s28 = sadd.s32 %s21, 1
      %s29 = ssub.s32 %s21, %s28
      %p30 = scmp.eq.s32.totalorder %s29, 0
      %s32 = sadd.s32 %s31, 1
      %s33 = scalar_select %p30, %s31, %s32
      %p36 = pneg %p30
      %p37 = scmp.eq.s32.totalorder %s21, 1
      %p38 = por %p36, %p37
      %p39 = scmp.ne.s32.totalorder %s31, %s34
      %p40 = scmp.eq.s32.totalorder %s21, 0
      %p41 = por %p39, %p40
      %p42 = scmp.ne.s32.totalorder %s31, %s34
      %p43 = scmp.eq.s32.totalorder %s26, 1
      %p44 = por %p42, %p43
      %p45 = scmp.ne.s32.totalorder %s34, %s35
      %p46 = scmp.eq.s32.totalorder %s26, 0
      %p47 = por %p45, %p46
      %p48 = scmp.ne.s32.totalorder %s34, %s35
      %p49 = scmp.eq.s32.totalorder %s27, 1
      %p50 = por %p48, %p49
      %p52 = scmp.ne.s32.totalorder %s35, %s51
      %p53 = scmp.eq.s32.totalorder %s27, 0
      %p54 = por %p52, %p53
      %s56 = sadd.s32 %s55, 1
      %p59 = scmp.eq.s32.totalorder %s21, 1
      %p60 = scmp.ne.s32.totalorder %s55, %s57
      %p61 = scmp.eq.s32.totalorder %s21, 0
      %p62 = por %p60, %p61
      %p63 = scmp.ne.s32.totalorder %s55, %s57
      %p64 = scmp.eq.s32.totalorder %s26, 1
      %p65 = por %p63, %p64
      %p66 = scmp.ne.s32.totalorder %s57, %s58
      %p67 = scmp.eq.s32.totalorder %s26, 0
      %p68 = por %p66, %p67
      %p69 = scmp.ne.s32.totalorder %s57, %s58
      %p70 = scmp.eq.s32.totalorder %s27, 1
      %p71 = por %p69, %p70
      %p73 = scmp.ne.s32.totalorder %s58, %s72
      %p74 = scmp.eq.s32.totalorder %s27, 0
      %p75 = por %p73, %p74
      %s77 = sadd.s32 %s76, 1
      %p80 = scmp.eq.s32.totalorder %s21, 1
      %p81 = scmp.ne.s32.totalorder %s76, %s78
      %p82 = scmp.eq.s32.totalorder %s21, 0
      %p83 = por %p81, %p82
      %p84 = scmp.ne.s32.totalorder %s76, %s78
      %p85 = scmp.eq.s32.totalorder %s26, 1
      %p86 = por %p84, %p85
      %p87 = scmp.ne.s32.totalorder %s78, %s79
      %p88 = scmp.eq.s32.totalorder %s26, 0
      %p89 = por %p87, %p88
      %p90 = scmp.ne.s32.totalorder %s78, %s79
      %p91 = scmp.eq.s32.totalorder %s27, 1
      %p92 = por %p90, %p91
      %p94 = scmp.ne.s32.totalorder %s79, %s93
      %p95 = scmp.eq.s32.totalorder %s27, 0
      %p96 = por %p94, %p95
      %s98 = sadd.s32 %s97, 1
      %p101 = scmp.eq.s32.totalorder %s21, 1
      %p102 = scmp.ne.s32.totalorder %s97, %s99
      %p103 = scmp.eq.s32.totalorder %s21, 0
      %p104 = por %p102, %p103
      %p105 = scmp.ne.s32.totalorder %s97, %s99
      %p106 = scmp.eq.s32.totalorder %s26, 1
      %p107 = por %p105, %p106
      %p108 = scmp.ne.s32.totalorder %s99, %s100
      %p109 = scmp.eq.s32.totalorder %s26, 0
      %p110 = por %p108, %p109
      %p111 = scmp.ne.s32.totalorder %s99, %s100
      %p112 = scmp.eq.s32.totalorder %s27, 1
      %p113 = por %p111, %p112
      %p115 = scmp.ne.s32.totalorder %s100, %s114
      %p116 = scmp.eq.s32.totalorder %s27, 0
      %p117 = por %p115, %p116
      %s119 = sadd.s32 %s118, 1
      %p122 = scmp.eq.s32.totalorder %s21, 1
      %p123 = scmp.ne.s32.totalorder %s118, %s120
      %p124 = scmp.eq.s32.totalorder %s21, 0
      %p125 = por %p123, %p124
      %p126 = scmp.ne.s32.totalorder %s118, %s120
      %p127 = scmp.eq.s32.totalorder %s26, 1
      %p128 = por %p126, %p127
      %p129 = scmp.ne.s32.totalorder %s120, %s121
      %p130 = scmp.eq.s32.totalorder %s26, 0
      %p131 = por %p129, %p130
      %p132 = scmp.ne.s32.totalorder %s120, %s121
      %p133 = scmp.eq.s32.totalorder %s27, 1
      %p134 = por %p132, %p133
      %p136 = scmp.ne.s32.totalorder %s121, %s135
      %p137 = scmp.eq.s32.totalorder %s27, 0
      %p138 = por %p136, %p137
      %s140 = sadd.s32 %s139, 1
      %p143 = scmp.eq.s32.totalorder %s21, 1
      %p144 = scmp.ne.s32.totalorder %s139, %s141
      %p145 = scmp.eq.s32.totalorder %s21, 0
      %p146 = por %p144, %p145
      %p147 = scmp.ne.s32.totalorder %s139, %s141
      %p148 = scmp.eq.s32.totalorder %s26, 1
      %p149 = por %p147, %p148
      %p150 = scmp.ne.s32.totalorder %s141, %s142
      %p151 = scmp.eq.s32.totalorder %s26, 0
      %p152 = por %p150, %p151
      %p153 = scmp.ne.s32.totalorder %s141, %s142
      %p154 = scmp.eq.s32.totalorder %s27, 1
      %p155 = por %p153, %p154
      %p157 = scmp.ne.s32.totalorder %s142, %s156
      %p158 = scmp.eq.s32.totalorder %s27, 0
      %p159 = por %p157, %p158
      %s161 = sadd.s32 %s160, 1
      %p164 = scmp.eq.s32.totalorder %s21, 1
      %p165 = scmp.ne.s32.totalorder %s160, %s162
      %p166 = scmp.eq.s32.totalorder %s21, 0
      %p167 = por %p165, %p166
      %p168 = scmp.ne.s32.totalorder %s160, %s162
      %p169 = scmp.eq.s32.totalorder %s26, 1
      %p170 = por %p168, %p169
      %p171 = scmp.ne.s32.totalorder %s162, %s163
      %p172 = scmp.eq.s32.totalorder %s26, 0
      %p173 = por %p171, %p172
      %p174 = scmp.ne.s32.totalorder %s162, %s163
      %p175 = scmp.eq.s32.totalorder %s27, 1
      %p176 = por %p174, %p175
      %p178 = scmp.ne.s32.totalorder %s163, %s177
      %p179 = scmp.eq.s32.totalorder %s27, 0
      %p180 = por %p178, %p179
      %s182 = sadd.s32 %s181, 1
      %p185 = scmp.eq.s32.totalorder %s21, 1
      %p186 = scmp.ne.s32.totalorder %s181, %s183
      %p187 = scmp.eq.s32.totalorder %s21, 0
      %p188 = por %p186, %p187
      %p189 = scmp.ne.s32.totalorder %s181, %s183
      %p190 = scmp.eq.s32.totalorder %s26, 1
      %p191 = por %p189, %p190
      %p192 = scmp.ne.s32.totalorder %s183, %s184
      %p193 = scmp.eq.s32.totalorder %s26, 0
      %p194 = por %p192, %p193
      %p195 = scmp.ne.s32.totalorder %s183, %s184
      %p196 = scmp.eq.s32.totalorder %s27, 1
      %p197 = por %p195, %p196
      %p199 = scmp.ne.s32.totalorder %s184, %s198
      %p200 = scmp.eq.s32.totalorder %s27, 0
      %p201 = por %p199, %p200
      %s203 = sadd.s32 %s202, 1
      %p206 = scmp.eq.s32.totalorder %s21, 1
      %p207 = scmp.ne.s32.totalorder %s202, %s204
      %p208 = scmp.eq.s32.totalorder %s21, 0
      %p209 = por %p207, %p208
      %p210 = scmp.ne.s32.totalorder %s202, %s204
      %p211 = scmp.eq.s32.totalorder %s26, 1
      %p212 = por %p210, %p211
      %p213 = scmp.ne.s32.totalorder %s204, %s205
      %p214 = scmp.eq.s32.totalorder %s26, 0
      %p215 = por %p213, %p214
      %p216 = scmp.ne.s32.totalorder %s204, %s205
      %p217 = scmp.eq.s32.totalorder %s27, 1
      %p218 = por %p216, %p217
      %p220 = scmp.ne.s32.totalorder %s205, %s219
      %p221 = scmp.eq.s32.totalorder %s27, 0
      %p222 = por %p220, %p221
      %s224 = sadd.s32 %s223, 1
      %p227 = scmp.eq.s32.totalorder %s21, 1
      %p228 = scmp.ne.s32.totalorder %s223, %s225
      %p229 = scmp.eq.s32.totalorder %s21, 0
      %p230 = por %p228, %p229
      %p231 = scmp.ne.s32.totalorder %s223, %s225
      %p232 = scmp.eq.s32.totalorder %s26, 1
      %p233 = por %p231, %p232
      %p234 = scmp.ne.s32.totalorder %s225, %s226
      %p235 = scmp.eq.s32.totalorder %s26, 0
      %p236 = por %p234, %p235
      %p237 = scmp.ne.s32.totalorder %s225, %s226
      %p238 = scmp.eq.s32.totalorder %s27, 1
      %p239 = por %p237, %p238
      %p241 = scmp.ne.s32.totalorder %s226, %s240
      %p242 = scmp.eq.s32.totalorder %s27, 0
      %p243 = por %p241, %p242
      %s245 = sadd.s32 %s244, 1
      %p248 = scmp.eq.s32.totalorder %s21, 1
      %p249 = scmp.ne.s32.totalorder %s244, %s246
      %p250 = scmp.eq.s32.totalorder %s21, 0
      %p251 = por %p249, %p250
      %p252 = scmp.ne.s32.totalorder %s244, %s246
      %p253 = scmp.eq.s32.totalorder %s26, 1
      %p254 = por %p252, %p253
      %p255 = scmp.ne.s32.totalorder %s246, %s247
      %p256 = scmp.eq.s32.totalorder %s26, 0
      %p257 = por %p255, %p256
      %p258 = scmp.ne.s32.totalorder %s246, %s247
      %p259 = scmp.eq.s32.totalorder %s27, 1
      %p260 = por %p258, %p259
      %p262 = scmp.ne.s32.totalorder %s247, %s261
      %p263 = scmp.eq.s32.totalorder %s27, 0
      %p264 = por %p262, %p263
      %s266 = sadd.s32 %s265, 1
      %p269 = scmp.eq.s32.totalorder %s21, 1
      %p270 = scmp.ne.s32.totalorder %s265, %s267
      %p271 = scmp.eq.s32.totalorder %s21, 0
      %p272 = por %p270, %p271
      %p273 = scmp.ne.s32.totalorder %s265, %s267
      %p274 = scmp.eq.s32.totalorder %s26, 1
      %p275 = por %p273, %p274
      %p276 = scmp.ne.s32.totalorder %s267, %s268
      %p277 = scmp.eq.s32.totalorder %s26, 0
      %p278 = por %p276, %p277
      %p279 = scmp.ne.s32.totalorder %s267, %s268
      %p280 = scmp.eq.s32.totalorder %s27, 1
      %p281 = por %p279, %p280
      %p283 = scmp.ne.s32.totalorder %s268, %s282
      %p284 = scmp.eq.s32.totalorder %s27, 0
      %p285 = por %p283, %p284
      %s286 = ssub.s32 %s21, %s28
      %p287 = scmp.eq.s32.totalorder %s286, 0
      %s289 = sadd.s32 %s288, 1
      %s290 = scalar_select %p287, %s288, %s289
      %p293 = pneg %p287
      %p294 = scmp.eq.s32.totalorder %s21, 1
      %p295 = por %p293, %p294
      %p296 = scmp.ne.s32.totalorder %s288, %s291
      %p297 = scmp.eq.s32.totalorder %s21, 0
      %p298 = por %p296, %p297
      %p299 = scmp.ne.s32.totalorder %s288, %s291
      %p300 = scmp.eq.s32.totalorder %s26, 1
      %p301 = por %p299, %p300
      %p302 = scmp.ne.s32.totalorder %s291, %s292
      %p303 = scmp.eq.s32.totalorder %s26, 0
      %p304 = por %p302, %p303
      %p305 = scmp.ne.s32.totalorder %s291, %s292
      %p306 = scmp.eq.s32.totalorder %s27, 1
      %p307 = por %p305, %p306
      %p309 = scmp.ne.s32.totalorder %s292, %s308
      %p310 = scmp.eq.s32.totalorder %s27, 0
      %p311 = por %p309, %p310
      %p312 = scmp.le.s32.totalorder 1, %s21
      %p313 = scmp.lt.s32.totalorder %s21, 3
      %p314 = pnand %p312, %p313
      %p315 = pneg %p314
      // Predicated region
      $region9: #{tpu_custom_call.1} parent=5 // pred_check
        _
      $region10: #{tpu_custom_call.1} parent=5 // pred_check_branch
        %317 = sbr.rel (%p314) target = $region12
      $region11: #{tpu_custom_call.1} parent=5 // pred_region
        %s318 = ssub.s32 %s21, 1
        // Predicated region
        $region13: #{tpu_custom_call.1} parent=11 // pred_check
          %p319 = pneg %p68
        $region14: #{tpu_custom_call.1} parent=11 // pred_check_branch
          %321 = sbr.rel (%p319) target = $region16
        $region15: #{tpu_custom_call.1} parent=11 // pred_region
          _
        $region16: #{tpu_custom_call.1} parent=11 // pred_fallthru
          _
        // Predicated region
        $region17: #{tpu_custom_call.1} parent=11 // pred_check
          %p322 = pneg %p89
        $region18: #{tpu_custom_call.1} parent=11 // pred_check_branch
          %324 = sbr.rel (%p322) target = $region20
        $region19: #{tpu_custom_call.1} parent=11 // pred_region
          _
        $region20: #{tpu_custom_call.1} parent=11 // pred_fallthru
          _
        // Predicated region
        $region21: #{tpu_custom_call.1} parent=11 // pred_check
          %p325 = pneg %p110
        $region22: #{tpu_custom_call.1} parent=11 // pred_check_branch
          %327 = sbr.rel (%p325) target = $region24
        $region23: #{tpu_custom_call.1} parent=11 // pred_region
          _
        $region24: #{tpu_custom_call.1} parent=11 // pred_fallthru
          _
        // Predicated region
        $region25: #{tpu_custom_call.1} parent=11 // pred_check
          %p328 = pneg %p131
        $region26: #{tpu_custom_call.1} parent=11 // pred_check_branch
          %330 = sbr.rel (%p328) target = $region28
        $region27: #{tpu_custom_call.1} parent=11 // pred_region
          _
        $region28: #{tpu_custom_call.1} parent=11 // pred_fallthru
          _
        // Predicated region
        $region29: #{tpu_custom_call.1} parent=11 // pred_check
          %p331 = pneg %p152
        $region30: #{tpu_custom_call.1} parent=11 // pred_check_branch
          %333 = sbr.rel (%p331) target = $region32
        $region31: #{tpu_custom_call.1} parent=11 // pred_region
          _
        $region32: #{tpu_custom_call.1} parent=11 // pred_fallthru
          _
        // Predicated region
        $region33: #{tpu_custom_call.1} parent=11 // pred_check
          %p334 = pneg %p173
        $region34: #{tpu_custom_call.1} parent=11 // pred_check_branch
          %336 = sbr.rel (%p334) target = $region36
        $region35: #{tpu_custom_call.1} parent=11 // pred_region
          _
        $region36: #{tpu_custom_call.1} parent=11 // pred_fallthru
          _
        // Predicated region
        $region37: #{tpu_custom_call.1} parent=11 // pred_check
          %p337 = pneg %p194
        $region38: #{tpu_custom_call.1} parent=11 // pred_check_branch
          %339 = sbr.rel (%p337) target = $region40
        $region39: #{tpu_custom_call.1} parent=11 // pred_region
          _
        $region40: #{tpu_custom_call.1} parent=11 // pred_fallthru
          _
        // Predicated region
        $region41: #{tpu_custom_call.1} parent=11 // pred_check
          %p340 = pneg %p215
        $region42: #{tpu_custom_call.1} parent=11 // pred_check_branch
          %342 = sbr.rel (%p340) target = $region44
        $region43: #{tpu_custom_call.1} parent=11 // pred_region
          _
        $region44: #{tpu_custom_call.1} parent=11 // pred_fallthru
          _
        // Predicated region
        $region45: #{tpu_custom_call.1} parent=11 // pred_check
          %p343 = pneg %p236
        $region46: #{tpu_custom_call.1} parent=11 // pred_check_branch
          %345 = sbr.rel (%p343) target = $region48
        $region47: #{tpu_custom_call.1} parent=11 // pred_region
          _
        $region48: #{tpu_custom_call.1} parent=11 // pred_fallthru
          _
        // Predicated region
        $region49: #{tpu_custom_call.1} parent=11 // pred_check
          %p346 = pneg %p257
        $region50: #{tpu_custom_call.1} parent=11 // pred_check_branch
          %348 = sbr.rel (%p346) target = $region52
        $region51: #{tpu_custom_call.1} parent=11 // pred_region
          _
        $region52: #{tpu_custom_call.1} parent=11 // pred_fallthru
          _
        // Predicated region
        $region53: #{tpu_custom_call.1} parent=11 // pred_check
          %p349 = pneg %p278
        $region54: #{tpu_custom_call.1} parent=11 // pred_check_branch
          %351 = sbr.rel (%p349) target = $region56
        $region55: #{tpu_custom_call.1} parent=11 // pred_region
          _
        $region56: #{tpu_custom_call.1} parent=11 // pred_fallthru
          _
      $region12: #{tpu_custom_call.1} parent=5 // pred_fallthru
        _
      %p352 = scmp.lt.s32.totalorder %s21, 2
      // Predicated region
      $region57: #{tpu_custom_call.1} parent=5 // pred_check
        %p353 = pneg %p352
      $region58: #{tpu_custom_call.1} parent=5 // pred_check_branch
        %355 = sbr.rel (%p353) target = $region60
      $region59: #{tpu_custom_call.1} parent=5 // pred_region
        // Predicated region
        $region61: #{tpu_custom_call.1} parent=59 // pred_check
          %p356 = pneg %p41
        $region62: #{tpu_custom_call.1} parent=59 // pred_check_branch
          %358 = sbr.rel (%p356) target = $region64
        $region63: #{tpu_custom_call.1} parent=59 // pred_region
          %p359 = scmp.lt.s32.totalorder %s21, 1
          %s360 = scalar_select %p359, %s21, 1
          %s361 = smul.addr %s360, 8
          %s362 = scalar_lea.vmem %s0, %s361
        $region64: #{tpu_custom_call.1} parent=59 // pred_fallthru
          _
      $region60: #{tpu_custom_call.1} parent=5 // pred_fallthru
        _
      %p363 = scmp.le.s32.totalorder 1, %s21
      %p364 = scmp.lt.s32.totalorder %s21, 3
      %p365 = pnand %p363, %p364
      %p366 = pneg %p365
      // Predicated region
      $region65: #{tpu_custom_call.1} parent=5 // pred_check
        _
      $region66: #{tpu_custom_call.1} parent=5 // pred_check_branch
        %368 = sbr.rel (%p365) target = $region68
      $region67: #{tpu_custom_call.1} parent=5 // pred_region
        %s369 = ssub.s32 %s21, 1
        %p370 = scmp.lt.s32.totalorder %s26, 1
        %s371 = scalar_select %p370, %s26, 1
        %s372 = smul.addr %s371, 8
        %s373 = scalar_lea.vmem %s0, %s372
        %p374 = pneg %p47
        %p375 = pneg %p44
        %p376 = pneg %p68
        %p377 = pneg %p65
        %p378 = pneg %p89
        %p379 = pneg %p86
        %p380 = pneg %p110
        %p381 = pneg %p107
        %p382 = pneg %p131
        %p383 = pneg %p128
        %p384 = pneg %p152
        %p385 = pneg %p149
        %p386 = pneg %p173
        %p387 = pneg %p170
        %p388 = pneg %p194
        %p389 = pneg %p191
        %p390 = pneg %p215
        %p391 = pneg %p212
        %p392 = pneg %p236
        %p393 = pneg %p233
        %p394 = pneg %p257
        %p395 = pneg %p254
        %p396 = pneg %p278
        %p397 = pneg %p275
        %p398 = pneg %p304
        %p399 = pneg %p301
        %s400 = sand.u32 %s291, 1
        %s401 = scalar_lea.sflag [#allocation3], %s400
        %s402 = sand.u32 %s291, 1
        %s403 = smul.addr %s402, 8
        %s404 = scalar_lea.vmem [#allocation2], %s403
        %p405 = scmp.lt.s32.totalorder %s26, 1
        %s406 = scalar_select %p405, %s26, 1
        %s407 = smul.addr %s406, 8
        %s408 = scalar_lea.vmem %s0, %s407
        %v410 = vld [vmem:[%s408] sm:$0xff]
        %v411 = vld [vmem:[%s4] sm:$0x1]
        %v412 = vld [vmem:[%s5] sm:$0x1]
        %vm413 = vcmask 261120
        %v414 = vsel %vm413, %v410, 0.0
        %415 = vadd.xlane.f32.xlu0 %v414
        %v416 = vpop.xlane.xlu0 %415
        %v417 = vrcp.pop 32.0
        %v418 = vmul.f32 %v416, %v417
        %v419 = vsub.f32 %v410, %v418
        %v420 = vmul.f32 %v419, %v419
        %v421 = vsel %vm413, %v420, 0.0
        %422 = vadd.xlane.f32.xlu0 %v421
        %v423 = vpop.xlane.xlu0 %422
        %v424 = vmul.f32 %v423, %v417
        %v425 = vadd.f32 %v424, 1e-05
        %v426 = vrsqrt.pop %v425
        %v427 = vmul.f32 %v419, %v426
        %v429 = vlaneseq
        %v430 = vshrl.u32 %v429, 7
        %v431 = vsub.s32 0, %v430
        %v432 = vrot.slane %v411, %v431
        %v434 = vmul.f32 %v427, %v432
        %v436 = vlaneseq
        %v437 = vshrl.u32 %v436, 7
        %v438 = vsub.s32 0, %v437
        %v439 = vrot.slane %v412, %v438
        %v441 = vadd.f32 %v434, %v439
        %v442 = vpack.c.bf16 %v441, %v441
        %v443 = vld [vmem:[%s1] sm:$0xf]
        %v444 = vld [vmem:[%s1 + $0x4] sm:$0xf]
        %v445 = vld [vmem:[%s1 + $0x8] sm:$0xf]
        %v446 = vld [vmem:[%s1 + $0xc] sm:$0xf]
        %v451 = vunpack.c.l.b16 %v443
        %v452 = vunpack.c.l.b16 %v444
        %v453 = vunpack.c.l.b16 %v445
        %v454 = vunpack.c.l.b16 %v446
        %v455 = vpack.c.b16 %v452, %v451
        %v456 = vpack.c.b16 %v454, %v453
        %v460 = vsel %vm413, %v442, 0
        %462 = vmatprep.subr.bf16.mxu0 0
        %463 = vmatpush1.bf16.msra.mxu0 0
        %464 = vmatprep.subr.bf16.mxu0 0
        %465 = vmatpush1.bf16.msra.mxu0 0
        %466 = vmatprep.subr.bf16.mxu0 0
        %467 = vmatpush1.bf16.msra.mxu0 0
        %468 = vmatprep.subr.bf16.mxu0 0
        %469 = vmatpush1.bf16.msra.mxu0 0
        %470 = vmatprep.subr.bf16.mxu0 0
        %471 = vmatpush1.bf16.msra.mxu0 0
        %472 = vmatprep.subr.bf16.mxu0 0
        %473 = vmatpush1.bf16.msra.mxu0 0
        %474 = vmatprep.subr.bf16.mxu0 0
        %475 = vmatpush1.bf16.msra.mxu0 %v456
        %476 = vmatprep.subr.bf16.mxu0 0
        %477 = vmatpush1.bf16.msra.mxu0 %v455
        %478 = vmatprep.subr.bf16.mxu0 0
        %479 = vmatpush2.bf16.msra.mxu0 0
        %480 = vmatprep.subr.bf16.mxu0 0
        %481 = vmatpush2.bf16.msra.mxu0 0
        %482 = vmatprep.subr.bf16.mxu0 0
        %483 = vmatpush2.bf16.msra.mxu0 0
        %484 = vmatprep.subr.bf16.mxu0 0
        %485 = vmatpush2.bf16.msra.mxu0 0
        %486 = vmatprep.subr.bf16.mxu0 0
        %487 = vmatpush2.bf16.msra.mxu0 0
        %488 = vmatprep.subr.bf16.mxu0 0
        %489 = vmatpush2.bf16.msra.mxu0 0
        %490 = vmatprep.subr.bf16.mxu0 0
        %491 = vmatpush2.bf16.msra.mxu0 0
        %492 = vmatprep.subr.bf16.mxu0 0
        %493 = vmatpush2.bf16.msra.mxu0 0
        %494 = vmatprep.mubr.bf16.mxu0 0
        %495 = vmatmul.mubr.bf16.gmra.mxu0 %v460
        %v496 = vpop.f32.mrf.mxu0
        %v497 = vadd.f32 0.0, %v496
        %v498 = vpop.f32.mrf.mxu0
        %v499 = vpop.f32.mrf.mxu0
        %v500 = vpop.f32.mrf.mxu0
        %501 = vdwg.mxu0
        %503 = vrot.lane.b32.xlu0 %v497, 120
        %v504 = vpop.permute.xlu0 %503
        %506 = vrot.lane.b32.xlu0 %v497, 112
        %v507 = vpop.permute.xlu0 %506
        %509 = vrot.lane.b32.xlu0 %v497, 104
        %v510 = vpop.permute.xlu0 %509
        %v512 = vcombine.low %v497, %v507
        %v513 = vcombine.high %v497, %v507
        %v515 = vunpack.c.l.s4 1983009808
        %v516 = vunpack.c.0.s8 %v515
        %v517 = vlaneseq
        %v518 = vshrl.u32 %v517, 7
        %v519 = vsub.s32 %v516, %v518
        %v520 = vrot.slane %v512, %v519
        %v522 = vunpack.c.l.s4 1983009808
        %v523 = vunpack.c.0.s8 %v522
        %v524 = vlaneseq
        %v525 = vshrl.u32 %v524, 7
        %v526 = vsub.s32 %v523, %v525
        %v527 = vrot.slane %v513, %v526
        %v528 = vcombine.low %v504, %v510
        %v529 = vcombine.high %v504, %v510
        %v531 = vunpack.c.l.s4 1983009808
        %v532 = vunpack.c.0.s8 %v531
        %v533 = vlaneseq
        %v534 = vshrl.u32 %v533, 7
        %v535 = vsub.s32 %v532, %v534
        %v536 = vrot.slane %v528, %v535
        %v538 = vunpack.c.l.s4 1983009808
        %v539 = vunpack.c.0.s8 %v538
        %v540 = vlaneseq
        %v541 = vshrl.u32 %v540, 7
        %v542 = vsub.s32 %v539, %v541
        %v543 = vrot.slane %v529, %v542
        %v544 = vcombine.low %v520, %v536
        %v545 = vcombine.high %v520, %v536
        %v547 = vunpack.c.l.s4 1934713408
        %v548 = vunpack.c.0.s8 %v547
        %v549 = vlaneseq
        %v550 = vshrl.u32 %v549, 7
        %v551 = vsub.s32 %v548, %v550
        %v552 = vrot.slane %v544, %v551
        %v554 = vunpack.c.l.s4 1934713408
        %v555 = vunpack.c.0.s8 %v554
        %v556 = vlaneseq
        %v557 = vshrl.u32 %v556, 7
        %v558 = vsub.s32 %v555, %v557
        %v559 = vrot.slane %v545, %v558
        %v560 = vcombine.low %v527, %v543
        %v561 = vcombine.high %v527, %v543
        %v563 = vunpack.c.l.s4 1934713408
        %v564 = vunpack.c.0.s8 %v563
        %v565 = vlaneseq
        %v566 = vshrl.u32 %v565, 7
        %v567 = vsub.s32 %v564, %v566
        %v568 = vrot.slane %v560, %v567
        %v570 = vunpack.c.l.s4 1934713408
        %v571 = vunpack.c.0.s8 %v570
        %v572 = vlaneseq
        %v573 = vshrl.u32 %v572, 7
        %v574 = vsub.s32 %v571, %v573
        %v575 = vrot.slane %v561, %v574
        %v576 = vcombine.high %v552, 0.0
        %v577 = vcombine.high %v559, 0.0
        %v578 = vcombine.high %v568, 0.0
        %v579 = vcombine.high %v575, 0.0
        %v580 = vcombine.low %v552, %v559
        %v582 = vunpack.c.l.s4 1983009808
        %v583 = vunpack.c.0.s8 %v582
        %v584 = vlaneseq
        %v585 = vshrl.u32 %v584, 7
        %v586 = vsub.s32 %v583, %v585
        %v587 = vrot.slane %v580, %v586
        %v588 = vcombine.low %v576, %v577
        %v590 = vunpack.c.l.s4 1983009808
        %v591 = vunpack.c.0.s8 %v590
        %v592 = vlaneseq
        %v593 = vshrl.u32 %v592, 7
        %v594 = vsub.s32 %v591, %v593
        %v595 = vrot.slane %v588, %v594
        %v596 = vcombine.low %v568, %v575
        %v598 = vunpack.c.l.s4 1983009808
        %v599 = vunpack.c.0.s8 %v598
        %v600 = vlaneseq
        %v601 = vshrl.u32 %v600, 7
        %v602 = vsub.s32 %v599, %v601
        %v603 = vrot.slane %v596, %v602
        %v604 = vcombine.low %v578, %v579
        %v606 = vunpack.c.l.s4 1983009808
        %v607 = vunpack.c.0.s8 %v606
        %v608 = vlaneseq
        %v609 = vshrl.u32 %v608, 7
        %v610 = vsub.s32 %v607, %v609
        %v611 = vrot.slane %v604, %v610
        %v612 = vcombine.low %v587, %v595
        %v613 = vcombine.high %v587, %v595
        %v615 = vunpack.c.l.s4 1934713408
        %v616 = vunpack.c.0.s8 %v615
        %v617 = vlaneseq
        %v618 = vshrl.u32 %v617, 7
        %v619 = vsub.s32 %v616, %v618
        %v620 = vrot.slane %v612, %v619
        %v622 = vunpack.c.l.s4 1934713408
        %v623 = vunpack.c.0.s8 %v622
        %v624 = vlaneseq
        %v625 = vshrl.u32 %v624, 7
        %v626 = vsub.s32 %v623, %v625
        %v627 = vrot.slane %v613, %v626
        %v628 = vcombine.low %v603, %v611
        %v629 = vcombine.high %v603, %v611
        %v631 = vunpack.c.l.s4 1934713408
        %v632 = vunpack.c.0.s8 %v631
        %v633 = vlaneseq
        %v634 = vshrl.u32 %v633, 7
        %v635 = vsub.s32 %v632, %v634
        %v636 = vrot.slane %v628, %v635
        %v638 = vunpack.c.l.s4 1934713408
        %v639 = vunpack.c.0.s8 %v638
        %v640 = vlaneseq
        %v641 = vshrl.u32 %v640, 7
        %v642 = vsub.s32 %v639, %v641
        %v643 = vrot.slane %v629, %v642
        %v644 = vcombine.low %v620, %v636
        %v645 = vcombine.high %v620, %v636
        %v646 = vcombine.low %v627, %v643
        %v647 = vcombine.high %v627, %v643
        %v648 = vpack.c.bf16 %v644, %v644
        %v649 = vpack.c.bf16 %v645, %v645
        %v650 = vpack.c.bf16 %v646, %v646
        %v651 = vpack.c.bf16 %v647, %v647
        %652 = vrot.lane.b32.xlu0 %v497, 96
        %v653 = vpop.permute.xlu0 %652
        %654 = vrot.lane.b32.xlu0 %v504, 96
        %v655 = vpop.permute.xlu0 %654
        %656 = vrot.lane.b32.xlu0 %v507, 96
        %v657 = vpop.permute.xlu0 %656
        %658 = vrot.lane.b32.xlu0 %v510, 96
        %v659 = vpop.permute.xlu0 %658
        %v664 = vcombine.low %v653, %v657
        %v665 = vcombine.high %v653, %v657
        %v667 = vunpack.c.l.s4 1983009808
        %v668 = vunpack.c.0.s8 %v667
        %v669 = vlaneseq
        %v670 = vshrl.u32 %v669, 7
        %v671 = vsub.s32 %v668, %v670
        %v672 = vrot.slane %v664, %v671
        %v674 = vunpack.c.l.s4 1983009808
        %v675 = vunpack.c.0.s8 %v674
        %v676 = vlaneseq
        %v677 = vshrl.u32 %v676, 7
        %v678 = vsub.s32 %v675, %v677
        %v679 = vrot.slane %v665, %v678
        %v680 = vcombine.low %v655, %v659
        %v681 = vcombine.high %v655, %v659
        %v683 = vunpack.c.l.s4 1983009808
        %v684 = vunpack.c.0.s8 %v683
        %v685 = vlaneseq
        %v686 = vshrl.u32 %v685, 7
        %v687 = vsub.s32 %v684, %v686
        %v688 = vrot.slane %v680, %v687
        %v690 = vunpack.c.l.s4 1983009808
        %v691 = vunpack.c.0.s8 %v690
        %v692 = vlaneseq
        %v693 = vshrl.u32 %v692, 7
        %v694 = vsub.s32 %v691, %v693
        %v695 = vrot.slane %v681, %v694
        %v696 = vcombine.low %v672, %v688
        %v697 = vcombine.high %v672, %v688
        %v699 = vunpack.c.l.s4 1934713408
        %v700 = vunpack.c.0.s8 %v699
        %v701 = vlaneseq
        %v702 = vshrl.u32 %v701, 7
        %v703 = vsub.s32 %v700, %v702
        %v704 = vrot.slane %v696, %v703
        %v706 = vunpack.c.l.s4 1934713408
        %v707 = vunpack.c.0.s8 %v706
        %v708 = vlaneseq
        %v709 = vshrl.u32 %v708, 7
        %v710 = vsub.s32 %v707, %v709
        %v711 = vrot.slane %v697, %v710
        %v712 = vcombine.low %v679, %v695
        %v713 = vcombine.high %v679, %v695
        %v715 = vunpack.c.l.s4 1934713408
        %v716 = vunpack.c.0.s8 %v715
        %v717 = vlaneseq
        %v718 = vshrl.u32 %v717, 7
        %v719 = vsub.s32 %v716, %v718
        %v720 = vrot.slane %v712, %v719
        %v722 = vunpack.c.l.s4 1934713408
        %v723 = vunpack.c.0.s8 %v722
        %v724 = vlaneseq
        %v725 = vshrl.u32 %v724, 7
        %v726 = vsub.s32 %v723, %v725
        %v727 = vrot.slane %v713, %v726
        %v728 = vcombine.high %v704, 0.0
        %v729 = vcombine.high %v711, 0.0
        %v730 = vcombine.high %v720, 0.0
        %v731 = vcombine.high %v727, 0.0
        %v732 = vcombine.low %v704, %v711
        %v734 = vunpack.c.l.s4 1983009808
        %v735 = vunpack.c.0.s8 %v734
        %v736 = vlaneseq
        %v737 = vshrl.u32 %v736, 7
        %v738 = vsub.s32 %v735, %v737
        %v739 = vrot.slane %v732, %v738
        %v740 = vcombine.low %v728, %v729
        %v742 = vunpack.c.l.s4 1983009808
        %v743 = vunpack.c.0.s8 %v742
        %v744 = vlaneseq
        %v745 = vshrl.u32 %v744, 7
        %v746 = vsub.s32 %v743, %v745
        %v747 = vrot.slane %v740, %v746
        %v748 = vcombine.low %v720, %v727
        %v750 = vunpack.c.l.s4 1983009808
        %v751 = vunpack.c.0.s8 %v750
        %v752 = vlaneseq
        %v753 = vshrl.u32 %v752, 7
        %v754 = vsub.s32 %v751, %v753
        %v755 = vrot.slane %v748, %v754
        %v756 = vcombine.low %v730, %v731
        %v758 = vunpack.c.l.s4 1983009808
        %v759 = vunpack.c.0.s8 %v758
        %v760 = vlaneseq
        %v761 = vshrl.u32 %v760, 7
        %v762 = vsub.s32 %v759, %v761
        %v763 = vrot.slane %v756, %v762
        %v764 = vcombine.low %v739, %v747
        %v765 = vcombine.high %v739, %v747
        %v767 = vunpack.c.l.s4 1934713408
        %v768 = vunpack.c.0.s8 %v767
        %v769 = vlaneseq
        %v770 = vshrl.u32 %v769, 7
        %v771 = vsub.s32 %v768, %v770
        %v772 = vrot.slane %v764, %v771
        %v774 = vunpack.c.l.s4 1934713408
        %v775 = vunpack.c.0.s8 %v774
        %v776 = vlaneseq
        %v777 = vshrl.u32 %v776, 7
        %v778 = vsub.s32 %v775, %v777
        %v779 = vrot.slane %v765, %v778
        %v780 = vcombine.low %v755, %v763
        %v781 = vcombine.high %v755, %v763
        %v783 = vunpack.c.l.s4 1934713408
        %v784 = vunpack.c.0.s8 %v783
        %v785 = vlaneseq
        %v786 = vshrl.u32 %v785, 7
        %v787 = vsub.s32 %v784, %v786
        %v788 = vrot.slane %v780, %v787
        %v790 = vunpack.c.l.s4 1934713408
        %v791 = vunpack.c.0.s8 %v790
        %v792 = vlaneseq
        %v793 = vshrl.u32 %v792, 7
        %v794 = vsub.s32 %v791, %v793
        %v795 = vrot.slane %v781, %v794
        %v796 = vcombine.low %v772, %v788
        %v797 = vcombine.high %v772, %v788
        %v798 = vcombine.low %v779, %v795
        %v799 = vcombine.high %v779, %v795
        %v800 = vpack.c.bf16 %v796, %v796
        %v801 = vpack.c.bf16 %v797, %v797
        %v802 = vpack.c.bf16 %v798, %v798
        %v803 = vpack.c.bf16 %v799, %v799
        %804 = vrot.lane.b32.xlu0 %v497, 64
        %v805 = vpop.permute.xlu0 %804
        %806 = vrot.lane.b32.xlu0 %v504, 64
        %v807 = vpop.permute.xlu0 %806
        %808 = vrot.lane.b32.xlu0 %v507, 64
        %v809 = vpop.permute.xlu0 %808
        %810 = vrot.lane.b32.xlu0 %v510, 64
        %v811 = vpop.permute.xlu0 %810
        %v816 = vcombine.low %v805, %v809
        %v817 = vcombine.high %v805, %v809
        %v819 = vunpack.c.l.s4 1983009808
        %v820 = vunpack.c.0.s8 %v819
        %v821 = vlaneseq
        %v822 = vshrl.u32 %v821, 7
        %v823 = vsub.s32 %v820, %v822
        %v824 = vrot.slane %v816, %v823
        %v826 = vunpack.c.l.s4 1983009808
        %v827 = vunpack.c.0.s8 %v826
        %v828 = vlaneseq
        %v829 = vshrl.u32 %v828, 7
        %v830 = vsub.s32 %v827, %v829
        %v831 = vrot.slane %v817, %v830
        %v832 = vcombine.low %v807, %v811
        %v833 = vcombine.high %v807, %v811
        %v835 = vunpack.c.l.s4 1983009808
        %v836 = vunpack.c.0.s8 %v835
        %v837 = vlaneseq
        %v838 = vshrl.u32 %v837, 7
        %v839 = vsub.s32 %v836, %v838
        %v840 = vrot.slane %v832, %v839
        %v842 = vunpack.c.l.s4 1983009808
        %v843 = vunpack.c.0.s8 %v842
        %v844 = vlaneseq
        %v845 = vshrl.u32 %v844, 7
        %v846 = vsub.s32 %v843, %v845
        %v847 = vrot.slane %v833, %v846
        %v848 = vcombine.low %v824, %v840
        %v849 = vcombine.high %v824, %v840
        %v851 = vunpack.c.l.s4 1934713408
        %v852 = vunpack.c.0.s8 %v851
        %v853 = vlaneseq
        %v854 = vshrl.u32 %v853, 7
        %v855 = vsub.s32 %v852, %v854
        %v856 = vrot.slane %v848, %v855
        %v858 = vunpack.c.l.s4 1934713408
        %v859 = vunpack.c.0.s8 %v858
        %v860 = vlaneseq
        %v861 = vshrl.u32 %v860, 7
        %v862 = vsub.s32 %v859, %v861
        %v863 = vrot.slane %v849, %v862
        %v864 = vcombine.low %v831, %v847
        %v865 = vcombine.high %v831, %v847
        %v867 = vunpack.c.l.s4 1934713408
        %v868 = vunpack.c.0.s8 %v867
        %v869 = vlaneseq
        %v870 = vshrl.u32 %v869, 7
        %v871 = vsub.s32 %v868, %v870
        %v872 = vrot.slane %v864, %v871
        %v874 = vunpack.c.l.s4 1934713408
        %v875 = vunpack.c.0.s8 %v874
        %v876 = vlaneseq
        %v877 = vshrl.u32 %v876, 7
        %v878 = vsub.s32 %v875, %v877
        %v879 = vrot.slane %v865, %v878
        %v880 = vcombine.high %v856, 0.0
        %v881 = vcombine.high %v863, 0.0
        %v882 = vcombine.high %v872, 0.0
        %v883 = vcombine.high %v879, 0.0
        %v884 = vcombine.low %v856, %v863
        %v886 = vunpack.c.l.s4 1983009808
        %v887 = vunpack.c.0.s8 %v886
        %v888 = vlaneseq
        %v889 = vshrl.u32 %v888, 7
        %v890 = vsub.s32 %v887, %v889
        %v891 = vrot.slane %v884, %v890
        %v892 = vcombine.low %v880, %v881
        %v894 = vunpack.c.l.s4 1983009808
        %v895 = vunpack.c.0.s8 %v894
        %v896 = vlaneseq
        %v897 = vshrl.u32 %v896, 7
        %v898 = vsub.s32 %v895, %v897
        %v899 = vrot.slane %v892, %v898
        %v900 = vcombine.low %v872, %v879
        %v902 = vunpack.c.l.s4 1983009808
        %v903 = vunpack.c.0.s8 %v902
        %v904 = vlaneseq
        %v905 = vshrl.u32 %v904, 7
        %v906 = vsub.s32 %v903, %v905
        %v907 = vrot.slane %v900, %v906
        %v908 = vcombine.low %v882, %v883
        %v910 = vunpack.c.l.s4 1983009808
        %v911 = vunpack.c.0.s8 %v910
        %v912 = vlaneseq
        %v913 = vshrl.u32 %v912, 7
        %v914 = vsub.s32 %v911, %v913
        %v915 = vrot.slane %v908, %v914
        %v916 = vcombine.low %v891, %v899
        %v917 = vcombine.high %v891, %v899
        %v919 = vunpack.c.l.s4 1934713408
        %v920 = vunpack.c.0.s8 %v919
        %v921 = vlaneseq
        %v922 = vshrl.u32 %v921, 7
        %v923 = vsub.s32 %v920, %v922
        %v924 = vrot.slane %v916, %v923
        %v926 = vunpack.c.l.s4 1934713408
        %v927 = vunpack.c.0.s8 %v926
        %v928 = vlaneseq
        %v929 = vshrl.u32 %v928, 7
        %v930 = vsub.s32 %v927, %v929
        %v931 = vrot.slane %v917, %v930
        %v932 = vcombine.low %v907, %v915
        %v933 = vcombine.high %v907, %v915
        %v935 = vunpack.c.l.s4 1934713408
        %v936 = vunpack.c.0.s8 %v935
        %v937 = vlaneseq
        %v938 = vshrl.u32 %v937, 7
        %v939 = vsub.s32 %v936, %v938
        %v940 = vrot.slane %v932, %v939
        %v942 = vunpack.c.l.s4 1934713408
        %v943 = vunpack.c.0.s8 %v942
        %v944 = vlaneseq
        %v945 = vshrl.u32 %v944, 7
        %v946 = vsub.s32 %v943, %v945
        %v947 = vrot.slane %v933, %v946
        %v948 = vcombine.low %v924, %v940
        %v949 = vcombine.high %v924, %v940
        %v950 = vcombine.low %v931, %v947
        %v951 = vcombine.high %v931, %v947
        %v952 = vpack.c.bf16 %v948, %v948
        %v953 = vpack.c.bf16 %v949, %v949
        %v954 = vpack.c.bf16 %v950, %v950
        %v955 = vpack.c.bf16 %v951, %v951
        %v956 = vlaneseq
        %v957 = vshrl.u32 %v956, 7
        %v958 = vlaneseq
        %v959 = vand.u32 %v958, 127
        %vm960 = vcmp.ge.s32.totalorder %v957, %v959
        %v961 = vsel %vm960, 0.0, -1e+30
        %vm962 = vcmask 64512
        %v964 = vsel %vm962, %v648, 0
        %v967 = vsel %vm962, %v800, 0
        %969 = vmatprep.subr.bf16.mxu0 0
        %970 = vmatpush1.bf16.xpose.msra.mxu0 0
        %971 = vmatprep.subr.bf16.mxu0 0
        %972 = vmatpush1.bf16.xpose.msra.mxu0 0
        %973 = vmatprep.subr.bf16.mxu0 0
        %974 = vmatpush1.bf16.xpose.msra.mxu0 0
        %975 = vmatprep.subr.bf16.mxu0 0
        %976 = vmatpush1.bf16.xpose.msra.mxu0 0
        %977 = vmatprep.subr.bf16.mxu0 0
        %978 = vmatpush1.bf16.xpose.msra.mxu0 0
        %979 = vmatprep.subr.bf16.mxu0 0
        %980 = vmatpush1.bf16.xpose.msra.mxu0 0
        %981 = vmatprep.subr.bf16.mxu0 0
        %982 = vmatpush1.bf16.xpose.msra.mxu0 0
        %983 = vmatprep.subr.bf16.mxu0 0
        %984 = vmatpush1.bf16.xpose.msra.mxu0 %v967
        %985 = vmatprep.subr.bf16.mxu0 0
        %986 = vmatpush2.bf16.xpose.msra.mxu0 0
        %987 = vmatprep.subr.bf16.mxu0 0
        %988 = vmatpush2.bf16.xpose.msra.mxu0 0
        %989 = vmatprep.subr.bf16.mxu0 0
        %990 = vmatpush2.bf16.xpose.msra.mxu0 0
        %991 = vmatprep.subr.bf16.mxu0 0
        %992 = vmatpush2.bf16.xpose.msra.mxu0 0
        %993 = vmatprep.subr.bf16.mxu0 0
        %994 = vmatpush2.bf16.xpose.msra.mxu0 0
        %995 = vmatprep.subr.bf16.mxu0 0
        %996 = vmatpush2.bf16.xpose.msra.mxu0 0
        %997 = vmatprep.subr.bf16.mxu0 0
        %998 = vmatpush2.bf16.xpose.msra.mxu0 0
        %999 = vmatprep.subr.bf16.mxu0 0
        %1000 = vmatpush2.bf16.xpose.msra.mxu0 0
        %1001 = vmatprep.mubr.bf16.mxu0 0
        %1002 = vmatmul.mubr.bf16.gmra.mxu0 %v964
        %v1003 = vpop.f32.mrf.mxu0
        %v1004 = vadd.f32 %v961, %v1003
        %v1005 = vpop.f32.mrf.mxu0
        %v1006 = vpop.f32.mrf.mxu0
        %v1007 = vpop.f32.mrf.mxu0
        %1008 = vdwg.mxu0
        %v1010 = vsel %vm962, %v649, 0
        %v1013 = vsel %vm962, %v801, 0
        %1015 = vmatprep.subr.bf16.mxu0 0
        %1016 = vmatpush1.bf16.xpose.msra.mxu0 0
        %1017 = vmatprep.subr.bf16.mxu0 0
        %1018 = vmatpush1.bf16.xpose.msra.mxu0 0
        %1019 = vmatprep.subr.bf16.mxu0 0
        %1020 = vmatpush1.bf16.xpose.msra.mxu0 0
        %1021 = vmatprep.subr.bf16.mxu0 0
        %1022 = vmatpush1.bf16.xpose.msra.mxu0 0
        %1023 = vmatprep.subr.bf16.mxu0 0
        %1024 = vmatpush1.bf16.xpose.msra.mxu0 0
        %1025 = vmatprep.subr.bf16.mxu0 0
        %1026 = vmatpush1.bf16.xpose.msra.mxu0 0
        %1027 = vmatprep.subr.bf16.mxu0 0
        %1028 = vmatpush1.bf16.xpose.msra.mxu0 0
        %1029 = vmatprep.subr.bf16.mxu0 0
        %1030 = vmatpush1.bf16.xpose.msra.mxu0 %v1013
        %1031 = vmatprep.subr.bf16.mxu0 0
        %1032 = vmatpush2.bf16.xpose.msra.mxu0 0
        %1033 = vmatprep.subr.bf16.mxu0 0
        %1034 = vmatpush2.bf16.xpose.msra.mxu0 0
        %1035 = vmatprep.subr.bf16.mxu0 0
        %1036 = vmatpush2.bf16.xpose.msra.mxu0 0
        %1037 = vmatprep.subr.bf16.mxu0 0
        %1038 = vmatpush2.bf16.xpose.msra.mxu0 0
        %1039 = vmatprep.subr.bf16.mxu0 0
        %1040 = vmatpush2.bf16.xpose.msra.mxu0 0
        %1041 = vmatprep.subr.bf16.mxu0 0
        %1042 = vmatpush2.bf16.xpose.msra.mxu0 0
        %1043 = vmatprep.subr.bf16.mxu0 0
        %1044 = vmatpush2.bf16.xpose.msra.mxu0 0
        %1045 = vmatprep.subr.bf16.mxu0 0
        %1046 = vmatpush2.bf16.xpose.msra.mxu0 0
        %1047 = vmatprep.mubr.bf16.mxu0 0
        %1048 = vmatmul.mubr.bf16.gmra.mxu0 %v1010
        %v1049 = vpop.f32.mrf.mxu0
        %v1050 = vadd.f32 %v961, %v1049
        %v1051 = vpop.f32.mrf.mxu0
        %v1052 = vpop.f32.mrf.mxu0
        %v1053 = vpop.f32.mrf.mxu0
        %1054 = vdwg.mxu0
        %v1056 = vsel %vm962, %v650, 0
        %v1059 = vsel %vm962, %v802, 0
        %1061 = vmatprep.subr.bf16.mxu0 0
        %1062 = vmatpush1.bf16.xpose.msra.mxu0 0
        %1063 = vmatprep.subr.bf16.mxu0 0
        %1064 = vmatpush1.bf16.xpose.msra.mxu0 0
        %1065 = vmatprep.subr.bf16.mxu0 0
        %1066 = vmatpush1.bf16.xpose.msra.mxu0 0
        %1067 = vmatprep.subr.bf16.mxu0 0
        %1068 = vmatpush1.bf16.xpose.msra.mxu0 0
        %1069 = vmatprep.subr.bf16.mxu0 0
        %1070 = vmatpush1.bf16.xpose.msra.mxu0 0
        %1071 = vmatprep.subr.bf16.mxu0 0
        %1072 = vmatpush1.bf16.xpose.msra.mxu0 0
        %1073 = vmatprep.subr.bf16.mxu0 0
        %1074 = vmatpush1.bf16.xpose.msra.mxu0 0
        %1075 = vmatprep.subr.bf16.mxu0 0
        %1076 = vmatpush1.bf16.xpose.msra.mxu0 %v1059
        %1077 = vmatprep.subr.bf16.mxu0 0
        %1078 = vmatpush2.bf16.xpose.msra.mxu0 0
        %1079 = vmatprep.subr.bf16.mxu0 0
        %1080 = vmatpush2.bf16.xpose.msra.mxu0 0
        %1081 = vmatprep.subr.bf16.mxu0 0
        %1082 = vmatpush2.bf16.xpose.msra.mxu0 0
        %1083 = vmatprep.subr.bf16.mxu0 0
        %1084 = vmatpush2.bf16.xpose.msra.mxu0 0
        %1085 = vmatprep.subr.bf16.mxu0 0
        %1086 = vmatpush2.bf16.xpose.msra.mxu0 0
        %1087 = vmatprep.subr.bf16.mxu0 0
        %1088 = vmatpush2.bf16.xpose.msra.mxu0 0
        %1089 = vmatprep.subr.bf16.mxu0 0
        %1090 = vmatpush2.bf16.xpose.msra.mxu0 0
        %1091 = vmatprep.subr.bf16.mxu0 0
        %1092 = vmatpush2.bf16.xpose.msra.mxu0 0
        %1093 = vmatprep.mubr.bf16.mxu0 0
        %1094 = vmatmul.mubr.bf16.gmra.mxu0 %v1056
        %v1095 = vpop.f32.mrf.mxu0
        %v1096 = vadd.f32 %v961, %v1095
        %v1097 = vpop.f32.mrf.mxu0
        %v1098 = vpop.f32.mrf.mxu0
        %v1099 = vpop.f32.mrf.mxu0
        %1100 = vdwg.mxu0
        %v1102 = vsel %vm962, %v651, 0
        %v1105 = vsel %vm962, %v803, 0
        %1107 = vmatprep.subr.bf16.mxu0 0
        %1108 = vmatpush1.bf16.xpose.msra.mxu0 0
        %1109 = vmatprep.subr.bf16.mxu0 0
        %1110 = vmatpush1.bf16.xpose.msra.mxu0 0
        %1111 = vmatprep.subr.bf16.mxu0 0
        %1112 = vmatpush1.bf16.xpose.msra.mxu0 0
        %1113 = vmatprep.subr.bf16.mxu0 0
        %1114 = vmatpush1.bf16.xpose.msra.mxu0 0
        %1115 = vmatprep.subr.bf16.mxu0 0
        %1116 = vmatpush1.bf16.xpose.msra.mxu0 0
        %1117 = vmatprep.subr.bf16.mxu0 0
        %1118 = vmatpush1.bf16.xpose.msra.mxu0 0
        %1119 = vmatprep.subr.bf16.mxu0 0
        %1120 = vmatpush1.bf16.xpose.msra.mxu0 0
        %1121 = vmatprep.subr.bf16.mxu0 0
        %1122 = vmatpush1.bf16.xpose.msra.mxu0 %v1105
        %1123 = vmatprep.subr.bf16.mxu0 0
        %1124 = vmatpush2.bf16.xpose.msra.mxu0 0
        %1125 = vmatprep.subr.bf16.mxu0 0
        %1126 = vmatpush2.bf16.xpose.msra.mxu0 0
        %1127 = vmatprep.subr.bf16.mxu0 0
        %1128 = vmatpush2.bf16.xpose.msra.mxu0 0
        %1129 = vmatprep.subr.bf16.mxu0 0
        %1130 = vmatpush2.bf16.xpose.msra.mxu0 0
        %1131 = vmatprep.subr.bf16.mxu0 0
        %1132 = vmatpush2.bf16.xpose.msra.mxu0 0
        %1133 = vmatprep.subr.bf16.mxu0 0
        %1134 = vmatpush2.bf16.xpose.msra.mxu0 0
        %1135 = vmatprep.subr.bf16.mxu0 0
        %1136 = vmatpush2.bf16.xpose.msra.mxu0 0
        %1137 = vmatprep.subr.bf16.mxu0 0
        %1138 = vmatpush2.bf16.xpose.msra.mxu0 0
        %1139 = vmatprep.mubr.bf16.mxu0 0
        %1140 = vmatmul.mubr.bf16.gmra.mxu0 %v1102
        %v1141 = vpop.f32.mrf.mxu0
        %v1142 = vadd.f32 %v961, %v1141
        %v1143 = vpop.f32.mrf.mxu0
        %v1144 = vpop.f32.mrf.mxu0
        %v1145 = vpop.f32.mrf.mxu0
        %1146 = vdwg.mxu0
        %v1147 = vsel %vm962, %v1004, -inf
        %1148 = vmax.xlane.f32.xlu0 %v1147
        %v1149 = vpop.xlane.xlu0 %1148
        %v1150 = vsel %vm962, %v1050, -inf
        %1151 = vmax.xlane.f32.xlu0 %v1150
        %v1152 = vpop.xlane.xlu0 %1151
        %v1153 = vsel %vm962, %v1096, -inf
        %1154 = vmax.xlane.f32.xlu0 %v1153
        %v1155 = vpop.xlane.xlu0 %1154
        %v1156 = vsel %vm962, %v1142, -inf
        %1157 = vmax.xlane.f32.xlu0 %v1156
        %v1158 = vpop.xlane.xlu0 %1157
        %v1159 = vsub.f32 %v1004, %v1149
        %v1160 = vsub.f32 %v1050, %v1152
        %v1161 = vsub.f32 %v1096, %v1155
        %v1162 = vsub.f32 %v1142, %v1158
        %v1163 = vmul.f32 %v1159, 1.442695
        %v1164 = vpow.pop %v1163
        %v1165 = vmul.f32 %v1160, 1.442695
        %v1166 = vpow.pop %v1165
        %v1167 = vmul.f32 %v1161, 1.442695
        %v1168 = vpow.pop %v1167
        %v1169 = vmul.f32 %v1162, 1.442695
        %v1170 = vpow.pop %v1169
        %v1171 = vsel %vm962, %v1164, 0.0
        %1172 = vadd.xlane.f32.xlu0 %v1171
        %v1173 = vpop.xlane.xlu0 %1172
        %v1174 = vsel %vm962, %v1166, 0.0
        %1175 = vadd.xlane.f32.xlu0 %v1174
        %v1176 = vpop.xlane.xlu0 %1175
        %v1177 = vsel %vm962, %v1168, 0.0
        %1178 = vadd.xlane.f32.xlu0 %v1177
        %v1179 = vpop.xlane.xlu0 %1178
        %v1180 = vsel %vm962, %v1170, 0.0
        %1181 = vadd.xlane.f32.xlu0 %v1180
        %v1182 = vpop.xlane.xlu0 %1181
        %v1183 = vrcp.pop %v1173
        %v1184 = vrcp.pop %v1176
        %v1185 = vrcp.pop %v1179
        %v1186 = vrcp.pop %v1182
        %v1187 = vmul.f32 %v1164, %v1183
        %v1188 = vmul.f32 %v1166, %v1184
        %v1189 = vmul.f32 %v1168, %v1185
        %v1190 = vmul.f32 %v1170, %v1186
        %v1191 = vpack.c.bf16 %v1187, %v1187
        %v1192 = vpack.c.bf16 %v1188, %v1188
        %v1193 = vpack.c.bf16 %v1189, %v1189
        %v1194 = vpack.c.bf16 %v1190, %v1190
        %v1196 = vsel %vm962, %v1191, 0
        %vm1198 = vcmask 1043456
        %v1200 = vsel %vm1198, %v952, 0
        %1202 = vmatprep.subr.bf16.mxu0 0
        %1203 = vmatpush1.bf16.msra.mxu0 0
        %1204 = vmatprep.subr.bf16.mxu0 0
        %1205 = vmatpush1.bf16.msra.mxu0 0
        %1206 = vmatprep.subr.bf16.mxu0 0
        %1207 = vmatpush1.bf16.msra.mxu0 0
        %1208 = vmatprep.subr.bf16.mxu0 0
        %1209 = vmatpush1.bf16.msra.mxu0 0
        %1210 = vmatprep.subr.bf16.mxu0 0
        %1211 = vmatpush1.bf16.msra.mxu0 0
        %1212 = vmatprep.subr.bf16.mxu0 0
        %1213 = vmatpush1.bf16.msra.mxu0 0
        %1214 = vmatprep.subr.bf16.mxu0 0
        %1215 = vmatpush1.bf16.msra.mxu0 0
        %1216 = vmatprep.subr.bf16.mxu0 0
        %1217 = vmatpush1.bf16.msra.mxu0 %v1200
        %1218 = vmatprep.subr.bf16.mxu0 0
        %1219 = vmatpush2.bf16.msra.mxu0 0
        %1220 = vmatprep.subr.bf16.mxu0 0
        %1221 = vmatpush2.bf16.msra.mxu0 0
        %1222 = vmatprep.subr.bf16.mxu0 0
        %1223 = vmatpush2.bf16.msra.mxu0 0
        %1224 = vmatprep.subr.bf16.mxu0 0
        %1225 = vmatpush2.bf16.msra.mxu0 0
        %1226 = vmatprep.subr.bf16.mxu0 0
        %1227 = vmatpush2.bf16.msra.mxu0 0
        %1228 = vmatprep.subr.bf16.mxu0 0
        %1229 = vmatpush2.bf16.msra.mxu0 0
        %1230 = vmatprep.subr.bf16.mxu0 0
        %1231 = vmatpush2.bf16.msra.mxu0 0
        %1232 = vmatprep.subr.bf16.mxu0 0
        %1233 = vmatpush2.bf16.msra.mxu0 0
        %1234 = vmatprep.mubr.bf16.mxu0 0
        %1235 = vmatmul.mubr.bf16.gmra.mxu0 %v1196
        %v1236 = vpop.f32.mrf.mxu0
        %v1237 = vadd.f32 0.0, %v1236
        %v1238 = vpop.f32.mrf.mxu0
        %v1239 = vpop.f32.mrf.mxu0
        %v1240 = vpop.f32.mrf.mxu0
        %1241 = vdwg.mxu0
        %v1243 = vsel %vm962, %v1192, 0
        %v1246 = vsel %vm1198, %v953, 0
        %1248 = vmatprep.subr.bf16.mxu0 0
        %1249 = vmatpush1.bf16.msra.mxu0 0
        %1250 = vmatprep.subr.bf16.mxu0 0
        %1251 = vmatpush1.bf16.msra.mxu0 0
        %1252 = vmatprep.subr.bf16.mxu0 0
        %1253 = vmatpush1.bf16.msra.mxu0 0
        %1254 = vmatprep.subr.bf16.mxu0 0
        %1255 = vmatpush1.bf16.msra.mxu0 0
        %1256 = vmatprep.subr.bf16.mxu0 0
        %1257 = vmatpush1.bf16.msra.mxu0 0
        %1258 = vmatprep.subr.bf16.mxu0 0
        %1259 = vmatpush1.bf16.msra.mxu0 0
        %1260 = vmatprep.subr.bf16.mxu0 0
        %1261 = vmatpush1.bf16.msra.mxu0 0
        %1262 = vmatprep.subr.bf16.mxu0 0
        %1263 = vmatpush1.bf16.msra.mxu0 %v1246
        %1264 = vmatprep.subr.bf16.mxu0 0
        %1265 = vmatpush2.bf16.msra.mxu0 0
        %1266 = vmatprep.subr.bf16.mxu0 0
        %1267 = vmatpush2.bf16.msra.mxu0 0
        %1268 = vmatprep.subr.bf16.mxu0 0
        %1269 = vmatpush2.bf16.msra.mxu0 0
        %1270 = vmatprep.subr.bf16.mxu0 0
        %1271 = vmatpush2.bf16.msra.mxu0 0
        %1272 = vmatprep.subr.bf16.mxu0 0
        %1273 = vmatpush2.bf16.msra.mxu0 0
        %1274 = vmatprep.subr.bf16.mxu0 0
        %1275 = vmatpush2.bf16.msra.mxu0 0
        %1276 = vmatprep.subr.bf16.mxu0 0
        %1277 = vmatpush2.bf16.msra.mxu0 0
        %1278 = vmatprep.subr.bf16.mxu0 0
        %1279 = vmatpush2.bf16.msra.mxu0 0
        %1280 = vmatprep.mubr.bf16.mxu0 0
        %1281 = vmatmul.mubr.bf16.gmra.mxu0 %v1243
        %v1282 = vpop.f32.mrf.mxu0
        %v1283 = vadd.f32 0.0, %v1282
        %v1284 = vpop.f32.mrf.mxu0
        %v1285 = vpop.f32.mrf.mxu0
        %v1286 = vpop.f32.mrf.mxu0
        %1287 = vdwg.mxu0
        %v1289 = vsel %vm962, %v1193, 0
        %v1292 = vsel %vm1198, %v954, 0
        %1294 = vmatprep.subr.bf16.mxu0 0
        %1295 = vmatpush1.bf16.msra.mxu0 0
        %1296 = vmatprep.subr.bf16.mxu0 0
        %1297 = vmatpush1.bf16.msra.mxu0 0
        %1298 = vmatprep.subr.bf16.mxu0 0
        %1299 = vmatpush1.bf16.msra.mxu0 0
        %1300 = vmatprep.subr.bf16.mxu0 0
        %1301 = vmatpush1.bf16.msra.mxu0 0
        %1302 = vmatprep.subr.bf16.mxu0 0
        %1303 = vmatpush1.bf16.msra.mxu0 0
        %1304 = vmatprep.subr.bf16.mxu0 0
        %1305 = vmatpush1.bf16.msra.mxu0 0
        %1306 = vmatprep.subr.bf16.mxu0 0
        %1307 = vmatpush1.bf16.msra.mxu0 0
        %1308 = vmatprep.subr.bf16.mxu0 0
        %1309 = vmatpush1.bf16.msra.mxu0 %v1292
        %1310 = vmatprep.subr.bf16.mxu0 0
        %1311 = vmatpush2.bf16.msra.mxu0 0
        %1312 = vmatprep.subr.bf16.mxu0 0
        %1313 = vmatpush2.bf16.msra.mxu0 0
        %1314 = vmatprep.subr.bf16.mxu0 0
        %1315 = vmatpush2.bf16.msra.mxu0 0
        %1316 = vmatprep.subr.bf16.mxu0 0
        %1317 = vmatpush2.bf16.msra.mxu0 0
        %1318 = vmatprep.subr.bf16.mxu0 0
        %1319 = vmatpush2.bf16.msra.mxu0 0
        %1320 = vmatprep.subr.bf16.mxu0 0
        %1321 = vmatpush2.bf16.msra.mxu0 0
        %1322 = vmatprep.subr.bf16.mxu0 0
        %1323 = vmatpush2.bf16.msra.mxu0 0
        %1324 = vmatprep.subr.bf16.mxu0 0
        %1325 = vmatpush2.bf16.msra.mxu0 0
        %1326 = vmatprep.mubr.bf16.mxu0 0
        %1327 = vmatmul.mubr.bf16.gmra.mxu0 %v1289
        %v1328 = vpop.f32.mrf.mxu0
        %v1329 = vadd.f32 0.0, %v1328
        %v1330 = vpop.f32.mrf.mxu0
        %v1331 = vpop.f32.mrf.mxu0
        %v1332 = vpop.f32.mrf.mxu0
        %1333 = vdwg.mxu0
        %v1335 = vsel %vm962, %v1194, 0
        %v1338 = vsel %vm1198, %v955, 0
        %1340 = vmatprep.subr.bf16.mxu0 0
        %1341 = vmatpush1.bf16.msra.mxu0 0
        %1342 = vmatprep.subr.bf16.mxu0 0
        %1343 = vmatpush1.bf16.msra.mxu0 0
        %1344 = vmatprep.subr.bf16.mxu0 0
        %1345 = vmatpush1.bf16.msra.mxu0 0
        %1346 = vmatprep.subr.bf16.mxu0 0
        %1347 = vmatpush1.bf16.msra.mxu0 0
        %1348 = vmatprep.subr.bf16.mxu0 0
        %1349 = vmatpush1.bf16.msra.mxu0 0
        %1350 = vmatprep.subr.bf16.mxu0 0
        %1351 = vmatpush1.bf16.msra.mxu0 0
        %1352 = vmatprep.subr.bf16.mxu0 0
        %1353 = vmatpush1.bf16.msra.mxu0 0
        %1354 = vmatprep.subr.bf16.mxu0 0
        %1355 = vmatpush1.bf16.msra.mxu0 %v1338
        %1356 = vmatprep.subr.bf16.mxu0 0
        %1357 = vmatpush2.bf16.msra.mxu0 0
        %1358 = vmatprep.subr.bf16.mxu0 0
        %1359 = vmatpush2.bf16.msra.mxu0 0
        %1360 = vmatprep.subr.bf16.mxu0 0
        %1361 = vmatpush2.bf16.msra.mxu0 0
        %1362 = vmatprep.subr.bf16.mxu0 0
        %1363 = vmatpush2.bf16.msra.mxu0 0
        %1364 = vmatprep.subr.bf16.mxu0 0
        %1365 = vmatpush2.bf16.msra.mxu0 0
        %1366 = vmatprep.subr.bf16.mxu0 0
        %1367 = vmatpush2.bf16.msra.mxu0 0
        %1368 = vmatprep.subr.bf16.mxu0 0
        %1369 = vmatpush2.bf16.msra.mxu0 0
        %1370 = vmatprep.subr.bf16.mxu0 0
        %1371 = vmatpush2.bf16.msra.mxu0 0
        %1372 = vmatprep.mubr.bf16.mxu0 0
        %1373 = vmatmul.mubr.bf16.gmra.mxu0 %v1335
        %v1374 = vpop.f32.mrf.mxu0
        %v1375 = vadd.f32 0.0, %v1374
        %v1376 = vpop.f32.mrf.mxu0
        %v1377 = vpop.f32.mrf.mxu0
        %v1378 = vpop.f32.mrf.mxu0
        %1379 = vdwg.mxu0
        %v1380 = vcombine.low %v1237, %v1329
        %v1381 = vcombine.high %v1237, %v1329
        %v1383 = vunpack.c.l.s4 1983009808
        %v1384 = vunpack.c.0.s8 %v1383
        %v1385 = vlaneseq
        %v1386 = vshrl.u32 %v1385, 7
        %v1387 = vsub.s32 %v1384, %v1386
        %v1388 = vrot.slane %v1380, %v1387
        %v1390 = vunpack.c.l.s4 1983009808
        %v1391 = vunpack.c.0.s8 %v1390
        %v1392 = vlaneseq
        %v1393 = vshrl.u32 %v1392, 7
        %v1394 = vsub.s32 %v1391, %v1393
        %v1395 = vrot.slane %v1381, %v1394
        %v1396 = vcombine.low %v1283, %v1375
        %v1397 = vcombine.high %v1283, %v1375
        %v1399 = vunpack.c.l.s4 1983009808
        %v1400 = vunpack.c.0.s8 %v1399
        %v1401 = vlaneseq
        %v1402 = vshrl.u32 %v1401, 7
        %v1403 = vsub.s32 %v1400, %v1402
        %v1404 = vrot.slane %v1396, %v1403
        %v1406 = vunpack.c.l.s4 1983009808
        %v1407 = vunpack.c.0.s8 %v1406
        %v1408 = vlaneseq
        %v1409 = vshrl.u32 %v1408, 7
        %v1410 = vsub.s32 %v1407, %v1409
        %v1411 = vrot.slane %v1397, %v1410
        %v1412 = vcombine.low %v1388, %v1404
        %v1413 = vcombine.high %v1388, %v1404
        %v1415 = vunpack.c.l.s4 1934713408
        %v1416 = vunpack.c.0.s8 %v1415
        %v1417 = vlaneseq
        %v1418 = vshrl.u32 %v1417, 7
        %v1419 = vsub.s32 %v1416, %v1418
        %v1420 = vrot.slane %v1412, %v1419
        %v1422 = vunpack.c.l.s4 1934713408
        %v1423 = vunpack.c.0.s8 %v1422
        %v1424 = vlaneseq
        %v1425 = vshrl.u32 %v1424, 7
        %v1426 = vsub.s32 %v1423, %v1425
        %v1427 = vrot.slane %v1413, %v1426
        %v1428 = vcombine.low %v1395, %v1411
        %v1429 = vcombine.high %v1395, %v1411
        %v1431 = vunpack.c.l.s4 1934713408
        %v1432 = vunpack.c.0.s8 %v1431
        %v1433 = vlaneseq
        %v1434 = vshrl.u32 %v1433, 7
        %v1435 = vsub.s32 %v1432, %v1434
        %v1436 = vrot.slane %v1428, %v1435
        %v1438 = vunpack.c.l.s4 1934713408
        %v1439 = vunpack.c.0.s8 %v1438
        %v1440 = vlaneseq
        %v1441 = vshrl.u32 %v1440, 7
        %v1442 = vsub.s32 %v1439, %v1441
        %v1443 = vrot.slane %v1429, %v1442
        %v1444 = vcombine.high %v1420, 0.0
        %v1445 = vcombine.high %v1427, 0.0
        %v1446 = vcombine.high %v1436, 0.0
        %v1447 = vcombine.high %v1443, 0.0
        %v1448 = vcombine.low %v1420, %v1427
        %v1450 = vunpack.c.l.s4 1983009808
        %v1451 = vunpack.c.0.s8 %v1450
        %v1452 = vlaneseq
        %v1453 = vshrl.u32 %v1452, 7
        %v1454 = vsub.s32 %v1451, %v1453
        %v1455 = vrot.slane %v1448, %v1454
        %v1456 = vcombine.low %v1444, %v1445
        %v1458 = vunpack.c.l.s4 1983009808
        %v1459 = vunpack.c.0.s8 %v1458
        %v1460 = vlaneseq
        %v1461 = vshrl.u32 %v1460, 7
        %v1462 = vsub.s32 %v1459, %v1461
        %v1463 = vrot.slane %v1456, %v1462
        %v1464 = vcombine.low %v1436, %v1443
        %v1466 = vunpack.c.l.s4 1983009808
        %v1467 = vunpack.c.0.s8 %v1466
        %v1468 = vlaneseq
        %v1469 = vshrl.u32 %v1468, 7
        %v1470 = vsub.s32 %v1467, %v1469
        %v1471 = vrot.slane %v1464, %v1470
        %v1472 = vcombine.low %v1446, %v1447
        %v1474 = vunpack.c.l.s4 1983009808
        %v1475 = vunpack.c.0.s8 %v1474
        %v1476 = vlaneseq
        %v1477 = vshrl.u32 %v1476, 7
        %v1478 = vsub.s32 %v1475, %v1477
        %v1479 = vrot.slane %v1472, %v1478
        %v1480 = vcombine.low %v1455, %v1463
        %v1481 = vcombine.high %v1455, %v1463
        %v1483 = vunpack.c.l.s4 1934713408
        %v1484 = vunpack.c.0.s8 %v1483
        %v1485 = vlaneseq
        %v1486 = vshrl.u32 %v1485, 7
        %v1487 = vsub.s32 %v1484, %v1486
        %v1488 = vrot.slane %v1480, %v1487
        %v1490 = vunpack.c.l.s4 1934713408
        %v1491 = vunpack.c.0.s8 %v1490
        %v1492 = vlaneseq
        %v1493 = vshrl.u32 %v1492, 7
        %v1494 = vsub.s32 %v1491, %v1493
        %v1495 = vrot.slane %v1481, %v1494
        %v1496 = vcombine.low %v1471, %v1479
        %v1497 = vcombine.high %v1471, %v1479
        %v1499 = vunpack.c.l.s4 1934713408
        %v1500 = vunpack.c.0.s8 %v1499
        %v1501 = vlaneseq
        %v1502 = vshrl.u32 %v1501, 7
        %v1503 = vsub.s32 %v1500, %v1502
        %v1504 = vrot.slane %v1496, %v1503
        %v1506 = vunpack.c.l.s4 1934713408
        %v1507 = vunpack.c.0.s8 %v1506
        %v1508 = vlaneseq
        %v1509 = vshrl.u32 %v1508, 7
        %v1510 = vsub.s32 %v1507, %v1509
        %v1511 = vrot.slane %v1497, %v1510
        %v1512 = vcombine.low %v1488, %v1504
        %v1513 = vcombine.high %v1488, %v1504
        %v1514 = vcombine.low %v1495, %v1511
        %v1515 = vcombine.high %v1495, %v1511
        %1517 = vrot.lane.b32.xlu0 %v1513, 8
        %v1518 = vpop.permute.xlu0 %1517
        %1521 = vrot.lane.b32.xlu0 %v1514, 16
        %v1522 = vpop.permute.xlu0 %1521
        %1525 = vrot.lane.b32.xlu0 %v1515, 24
        %v1526 = vpop.permute.xlu0 %1525
        %v1528 = vsel %vm962, %v1512, %v1518
        %vm1529 = vcmask 130048
        %v1530 = vsel %vm1529, %v1528, %v1522
        %vm1531 = vcmask 195584
        %v1532 = vsel %vm1531, %v1530, %v1526
        %v1533 = vpack.c.bf16 %v1532, %v1532
        %v1534 = vld [vmem:[%s2] sm:$0xf]
        %v1535 = vld [vmem:[%s2 + $0x4] sm:$0xf]
        %v1536 = vld [vmem:[%s2 + $0x8] sm:$0xf]
        %v1537 = vld [vmem:[%s2 + $0xc] sm:$0xf]
        %v1538 = vld [vmem:[%s3] sm:$0x1]
        %v1540 = vlaneseq
        %v1541 = vshrl.u32 %v1540, 7
        %v1542 = vsub.s32 0, %v1541
        %v1543 = vrot.slane %v1538, %v1542
        %v1549 = vunpack.c.l.b16 %v1534
        %v1550 = vunpack.c.l.b16 %v1535
        %v1551 = vunpack.c.l.b16 %v1536
        %v1552 = vunpack.c.l.b16 %v1537
        %v1553 = vpack.c.b16 %v1550, %v1549
        %v1554 = vpack.c.b16 %v1552, %v1551
        %v1558 = vsel %vm413, %v1533, 0
        %1560 = vmatprep.subr.bf16.mxu0 0
        %1561 = vmatpush1.bf16.msra.mxu0 0
        %1562 = vmatprep.subr.bf16.mxu0 0
        %1563 = vmatpush1.bf16.msra.mxu0 0
        %1564 = vmatprep.subr.bf16.mxu0 0
        %1565 = vmatpush1.bf16.msra.mxu0 0
        %1566 = vmatprep.subr.bf16.mxu0 0
        %1567 = vmatpush1.bf16.msra.mxu0 0
        %1568 = vmatprep.subr.bf16.mxu0 0
        %1569 = vmatpush1.bf16.msra.mxu0 0
        %1570 = vmatprep.subr.bf16.mxu0 0
        %1571 = vmatpush1.bf16.msra.mxu0 0
        %1572 = vmatprep.subr.bf16.mxu0 0
        %1573 = vmatpush1.bf16.msra.mxu0 %v1554
        %1574 = vmatprep.subr.bf16.mxu0 0
        %1575 = vmatpush1.bf16.msra.mxu0 %v1553
        %1576 = vmatprep.subr.bf16.mxu0 0
        %1577 = vmatpush2.bf16.msra.mxu0 0
        %1578 = vmatprep.subr.bf16.mxu0 0
        %1579 = vmatpush2.bf16.msra.mxu0 0
        %1580 = vmatprep.subr.bf16.mxu0 0
        %1581 = vmatpush2.bf16.msra.mxu0 0
        %1582 = vmatprep.subr.bf16.mxu0 0
        %1583 = vmatpush2.bf16.msra.mxu0 0
        %1584 = vmatprep.subr.bf16.mxu0 0
        %1585 = vmatpush2.bf16.msra.mxu0 0
        %1586 = vmatprep.subr.bf16.mxu0 0
        %1587 = vmatpush2.bf16.msra.mxu0 0
        %1588 = vmatprep.subr.bf16.mxu0 0
        %1589 = vmatpush2.bf16.msra.mxu0 0
        %1590 = vmatprep.subr.bf16.mxu0 0
        %1591 = vmatpush2.bf16.msra.mxu0 0
        %1592 = vmatprep.mubr.bf16.mxu0 0
        %1593 = vmatmul.mubr.bf16.gmra.mxu0 %v1558
        %v1594 = vpop.f32.mrf.mxu0
        %v1595 = vadd.f32 %v1543, %v1594
        %v1596 = vpop.f32.mrf.mxu0
        %v1597 = vpop.f32.mrf.mxu0
        %v1598 = vpop.f32.mrf.mxu0
        %1599 = vdwg.mxu0
        %v1600 = vadd.f32 %v410, %v1595
        %v1601 = vld [vmem:[%s6] sm:$0x1]
        %v1602 = vld [vmem:[%s7] sm:$0x1]
        %v1603 = vsel %vm413, %v1600, 0.0
        %1604 = vadd.xlane.f32.xlu0 %v1603
        %v1605 = vpop.xlane.xlu0 %1604
        %v1606 = vmul.f32 %v1605, %v417
        %v1607 = vsub.f32 %v1600, %v1606
        %v1608 = vmul.f32 %v1607, %v1607
        %v1609 = vsel %vm413, %v1608, 0.0
        %1610 = vadd.xlane.f32.xlu0 %v1609
        %v1611 = vpop.xlane.xlu0 %1610
        %v1612 = vmul.f32 %v1611, %v417
        %v1613 = vadd.f32 %v1612, 1e-05
        %v1614 = vrsqrt.pop %v1613
        %v1615 = vmul.f32 %v1607, %v1614
        %v1617 = vlaneseq
        %v1618 = vshrl.u32 %v1617, 7
        %v1619 = vsub.s32 0, %v1618
        %v1620 = vrot.slane %v1601, %v1619
        %v1622 = vmul.f32 %v1615, %v1620
        %v1624 = vlaneseq
        %v1625 = vshrl.u32 %v1624, 7
        %v1626 = vsub.s32 0, %v1625
        %v1627 = vrot.slane %v1602, %v1626
        %v1629 = vadd.f32 %v1622, %v1627
        %v1630 = vpack.c.bf16 %v1629, %v1629
        %v1631 = vld [vmem:[%s8] sm:$0xf]
        %v1632 = vld [vmem:[%s8 + $0x4] sm:$0xf]
        %v1633 = vld [vmem:[%s8 + $0x8] sm:$0xf]
        %v1634 = vld [vmem:[%s8 + $0xc] sm:$0xf]
        %v1635 = vld [vmem:[%s9] sm:$0x1]
        %v1637 = vlaneseq
        %v1638 = vshrl.u32 %v1637, 7
        %v1639 = vsub.s32 0, %v1638
        %v1640 = vrot.slane %v1635, %v1639
        %v1646 = vunpack.c.l.b16 %v1631
        %v1647 = vunpack.c.l.b16 %v1632
        %v1648 = vunpack.c.l.b16 %v1633
        %v1649 = vunpack.c.l.b16 %v1634
        %v1650 = vpack.c.b16 %v1647, %v1646
        %v1651 = vpack.c.b16 %v1649, %v1648
        %v1655 = vsel %vm413, %v1630, 0
        %1657 = vmatprep.subr.bf16.mxu0 0
        %1658 = vmatpush1.bf16.msra.mxu0 0
        %1659 = vmatprep.subr.bf16.mxu0 0
        %1660 = vmatpush1.bf16.msra.mxu0 0
        %1661 = vmatprep.subr.bf16.mxu0 0
        %1662 = vmatpush1.bf16.msra.mxu0 0
        %1663 = vmatprep.subr.bf16.mxu0 0
        %1664 = vmatpush1.bf16.msra.mxu0 0
        %1665 = vmatprep.subr.bf16.mxu0 0
        %1666 = vmatpush1.bf16.msra.mxu0 0
        %1667 = vmatprep.subr.bf16.mxu0 0
        %1668 = vmatpush1.bf16.msra.mxu0 0
        %1669 = vmatprep.subr.bf16.mxu0 0
        %1670 = vmatpush1.bf16.msra.mxu0 %v1651
        %1671 = vmatprep.subr.bf16.mxu0 0
        %1672 = vmatpush1.bf16.msra.mxu0 %v1650
        %1673 = vmatprep.subr.bf16.mxu0 0
        %1674 = vmatpush2.bf16.msra.mxu0 0
        %1675 = vmatprep.subr.bf16.mxu0 0
        %1676 = vmatpush2.bf16.msra.mxu0 0
        %1677 = vmatprep.subr.bf16.mxu0 0
        %1678 = vmatpush2.bf16.msra.mxu0 0
        %1679 = vmatprep.subr.bf16.mxu0 0
        %1680 = vmatpush2.bf16.msra.mxu0 0
        %1681 = vmatprep.subr.bf16.mxu0 0
        %1682 = vmatpush2.bf16.msra.mxu0 0
        %1683 = vmatprep.subr.bf16.mxu0 0
        %1684 = vmatpush2.bf16.msra.mxu0 0
        %1685 = vmatprep.subr.bf16.mxu0 0
        %1686 = vmatpush2.bf16.msra.mxu0 0
        %1687 = vmatprep.subr.bf16.mxu0 0
        %1688 = vmatpush2.bf16.msra.mxu0 0
        %1689 = vmatprep.mubr.bf16.mxu0 0
        %1690 = vmatmul.mubr.bf16.gmra.mxu0 %v1655
        %v1691 = vpop.f32.mrf.mxu0
        %v1692 = vadd.f32 %v1640, %v1691
        %v1693 = vpop.f32.mrf.mxu0
        %v1694 = vpop.f32.mrf.mxu0
        %v1695 = vpop.f32.mrf.mxu0
        %1696 = vdwg.mxu0
        %v1697 = vmax.f32 %v1692, 0.0
        %v1698 = vpack.c.bf16 %v1697, %v1697
        %v1699 = vld [vmem:[%s10] sm:$0xf]
        %v1700 = vld [vmem:[%s10 + $0x4] sm:$0xf]
        %v1701 = vld [vmem:[%s10 + $0x8] sm:$0xf]
        %v1702 = vld [vmem:[%s10 + $0xc] sm:$0xf]
        %v1703 = vld [vmem:[%s10 + $0x10] sm:$0xf]
        %v1704 = vld [vmem:[%s10 + $0x14] sm:$0xf]
        %v1705 = vld [vmem:[%s10 + $0x18] sm:$0xf]
        %v1706 = vld [vmem:[%s10 + $0x1c] sm:$0xf]
        %v1707 = vld [vmem:[%s10 + $0x20] sm:$0xf]
        %v1708 = vld [vmem:[%s10 + $0x24] sm:$0xf]
        %v1709 = vld [vmem:[%s10 + $0x28] sm:$0xf]
        %v1710 = vld [vmem:[%s10 + $0x2c] sm:$0xf]
        %v1711 = vld [vmem:[%s10 + $0x30] sm:$0xf]
        %v1712 = vld [vmem:[%s10 + $0x34] sm:$0xf]
        %v1713 = vld [vmem:[%s10 + $0x38] sm:$0xf]
        %v1714 = vld [vmem:[%s10 + $0x3c] sm:$0xf]
        %v1715 = vld [vmem:[%s11] sm:$0x1]
        %v1717 = vlaneseq
        %v1718 = vshrl.u32 %v1717, 7
        %v1719 = vsub.s32 0, %v1718
        %v1720 = vrot.slane %v1715, %v1719
        %v1738 = vunpack.c.l.b16 %v1699
        %v1739 = vunpack.c.l.b16 %v1700
        %v1740 = vunpack.c.l.b16 %v1701
        %v1741 = vunpack.c.l.b16 %v1702
        %v1742 = vunpack.c.l.b16 %v1703
        %v1743 = vunpack.c.l.b16 %v1704
        %v1744 = vunpack.c.l.b16 %v1705
        %v1745 = vunpack.c.l.b16 %v1706
        %v1746 = vunpack.c.l.b16 %v1707
        %v1747 = vunpack.c.l.b16 %v1708
        %v1748 = vunpack.c.l.b16 %v1709
        %v1749 = vunpack.c.l.b16 %v1710
        %v1750 = vunpack.c.l.b16 %v1711
        %v1751 = vunpack.c.l.b16 %v1712
        %v1752 = vunpack.c.l.b16 %v1713
        %v1753 = vunpack.c.l.b16 %v1714
        %v1754 = vpack.c.b16 %v1739, %v1738
        %v1755 = vpack.c.b16 %v1741, %v1740
        %v1756 = vpack.c.b16 %v1743, %v1742
        %v1757 = vpack.c.b16 %v1745, %v1744
        %v1758 = vpack.c.b16 %v1747, %v1746
        %v1759 = vpack.c.b16 %v1749, %v1748
        %v1760 = vpack.c.b16 %v1751, %v1750
        %v1761 = vpack.c.b16 %v1753, %v1752
        %1770 = vmatprep.subr.bf16.mxu0 0
        %1771 = vmatpush1.bf16.msra.mxu0 %v1761
        %1772 = vmatprep.subr.bf16.mxu0 0
        %1773 = vmatpush1.bf16.msra.mxu0 %v1760
        %1774 = vmatprep.subr.bf16.mxu0 0
        %1775 = vmatpush1.bf16.msra.mxu0 %v1759
        %1776 = vmatprep.subr.bf16.mxu0 0
        %1777 = vmatpush1.bf16.msra.mxu0 %v1758
        %1778 = vmatprep.subr.bf16.mxu0 0
        %1779 = vmatpush1.bf16.msra.mxu0 %v1757
        %1780 = vmatprep.subr.bf16.mxu0 0
        %1781 = vmatpush1.bf16.msra.mxu0 %v1756
        %1782 = vmatprep.subr.bf16.mxu0 0
        %1783 = vmatpush1.bf16.msra.mxu0 %v1755
        %1784 = vmatprep.subr.bf16.mxu0 0
        %1785 = vmatpush1.bf16.msra.mxu0 %v1754
        %1786 = vmatprep.subr.bf16.mxu0 0
        %1787 = vmatpush2.bf16.msra.mxu0 0
        %1788 = vmatprep.subr.bf16.mxu0 0
        %1789 = vmatpush2.bf16.msra.mxu0 0
        %1790 = vmatprep.subr.bf16.mxu0 0
        %1791 = vmatpush2.bf16.msra.mxu0 0
        %1792 = vmatprep.subr.bf16.mxu0 0
        %1793 = vmatpush2.bf16.msra.mxu0 0
        %1794 = vmatprep.subr.bf16.mxu0 0
        %1795 = vmatpush2.bf16.msra.mxu0 0
        %1796 = vmatprep.subr.bf16.mxu0 0
        %1797 = vmatpush2.bf16.msra.mxu0 0
        %1798 = vmatprep.subr.bf16.mxu0 0
        %1799 = vmatpush2.bf16.msra.mxu0 0
        %1800 = vmatprep.subr.bf16.mxu0 0
        %1801 = vmatpush2.bf16.msra.mxu0 0
        %1802 = vmatprep.mubr.bf16.mxu0 0
        %1803 = vmatmul.mubr.bf16.gmra.mxu0 %v1698
        %v1804 = vpop.f32.mrf.mxu0
        %v1805 = vadd.f32 %v1720, %v1804
        %v1806 = vpop.f32.mrf.mxu0
        %v1807 = vpop.f32.mrf.mxu0
        %v1808 = vpop.f32.mrf.mxu0
        %1809 = vdwg.mxu0
        %v1810 = vadd.f32 %v1600, %v1805
        %1811 = vst.msk [vmem:[%s404] sm:$0xff] %vm413, %v1810
        %s1812 = sand.u32 %s291, 1
        %s1813 = scalar_lea.sflag [#allocation3], %s1812
        %s1814 = sand.u32 %s291, 1
        %s1815 = smul.addr %s1814, 8
        %s1816 = scalar_lea.vmem [#allocation2], %s1815
        // Predicated region
        $region69: #{tpu_custom_call.1} parent=67 // pred_check
          %p1817 = pneg %p301
        $region70: #{tpu_custom_call.1} parent=67 // pred_check_branch
          %1819 = sbr.rel (%p1817) target = $region72
        $region71: #{tpu_custom_call.1} parent=67 // pred_region
          %s1821 = ssub.s32 128, 128
          %1822 = vsyncadd %s1813, %s1821
          %s1823 = smul.addr %s26, 128
          %s1824 = scalar_lea.hbm %s12, %s1823
          %s1826 = sshll.u32 %s1816, 4
          %s1827 = int_to_ptr.vmem [resolvable:$true] %s1826
          %1829 = dma.vmem_to_hbm [thread:$0]  %s1827, 128, %s1824, %s1813
        $region72: #{tpu_custom_call.1} parent=67 // pred_fallthru
          _
      $region68: #{tpu_custom_call.1} parent=5 // pred_fallthru
        _
      %p1830 = scmp.le.s32.totalorder 2, %s21
      // Predicated region
      $region73: #{tpu_custom_call.1} parent=5 // pred_check
        %p1831 = pneg %p1830
      $region74: #{tpu_custom_call.1} parent=5 // pred_check_branch
        %1833 = sbr.rel (%p1831) target = $region76
      $region75: #{tpu_custom_call.1} parent=5 // pred_region
        %s1834 = ssub.s32 %s21, 2
        // Predicated region
        $region77: #{tpu_custom_call.1} parent=75 // pred_check
          %p1835 = pneg %p307
        $region78: #{tpu_custom_call.1} parent=75 // pred_check_branch
          %1837 = sbr.rel (%p1835) target = $region80
        $region79: #{tpu_custom_call.1} parent=75 // pred_region
          %s1838 = sand.u32 %s292, 1
          %s1839 = scalar_lea.sflag [#allocation3], %s1838
          %s1840 = sand.u32 %s292, 1
          %s1841 = smul.addr %s1840, 8
          %s1842 = scalar_lea.vmem [#allocation2], %s1841
          %1843 = dma.done %s1839, 128
        $region80: #{tpu_custom_call.1} parent=75 // pred_fallthru
          _
      $region76: #{tpu_custom_call.1} parent=5 // pred_fallthru
        _
    $region6: #{tpu_custom_call.1} parent=1 // loop_footer
      %s25 = sadd.s32 1, %s21
    $region7: #{tpu_custom_call.1} parent=1 // loop_footer_branch
      %20 = sbr.rel target = $region3
    $region8: #{tpu_custom_call.1} parent=1 // loop_exit
      _
    %1844 = vsyncpa [#allocation3], 1
    %s1845 = scalar_lea.sflag [#allocation3], 1
    %1846 = vsyncpa %s1845, 1

</llo_original>
